<compile_context>
chip_gen: v7x
topology: tpu7x:2x2x1
jax: 0.10.0
libtpu: 0.0.40
codegen_flags: <defaults>
</compile_context>

<pallas_src>
import functools
from math import sqrt

import jax
import jax.numpy as jnp
from jax.experimental import pallas as pl
from jax.experimental.pallas import tpu as pltpu


def _spatial_block_kernel(x_ref, adjt_ref, wbig_ref, bias_ref, bsum_ref,
                          pmean_ref, gsum_ref, o_ref, *, nb, cin, ll, norm):
    """One grid step processes `nb` batches held lane-dense as (V, nb*C_in*L).

    Column (n*cin*ll + c*ll + t) of x_ref holds x[n, c, v, t].
      adjt_ref : (V, V)                 adj_one^T
      wbig_ref : (cin*ll, C_out*ll)     kron(w^T, I_L)      (1x1 conv as one matmul)
      bias_ref : (1, C_out*ll)          conv bias repeated along L
      bsum_ref : (C_out*ll, C_out*ll)   block-diag ones: per-q softmax denom, bcast over t
      pmean_ref: (C_out*ll, ll)         stacked I_L / C_out: mean over C_out
      gsum_ref : (cin*ll, cin)          per-channel sum over t
    """
    f32 = jnp.float32
    cl = cin * ll

    x = x_ref[...].astype(f32)                 # (V, nb*cl)
    adjt = adjt_ref[...]
    wbig = wbig_ref[...]
    bias = bias_ref[...]
    bsum = bsum_ref[...]
    pmean = pmean_ref[...]
    gsum = gsum_ref[...]

    # ---- Dif_cov for the whole block: ONE wide (V,V)@(V, nb*cl) MXU push ----
    xd = jnp.dot(adjt, x, preferred_element_type=f32)          # (V, nb*cl)

    outs = []
    for n in range(nb):   # static unroll: static lane slices + full LLO visibility
        xd_n = xd[:, n * cl:(n + 1) * cl]                      # (V, cl)

        # 1x1 conv as a single lane-dense matmul (free dim = C_out*L lanes)
        logits = jnp.dot(xd_n, wbig, preferred_element_type=f32) + bias

        # softmax over time: shift by the per-row max (a constant inside every
        # (q, v) group, so softmax_t is unchanged); keeps exp() <= 1.
        e = jnp.exp(logits - jnp.max(logits, axis=1, keepdims=True))
        denom = jnp.dot(e, bsum, preferred_element_type=f32)   # group sums, bcast over t
        lsoft = e * pl.reciprocal(denom, approx=True)          # (V, C_out*ll)

        # AvgPool2d((C_out,1)) == mean over C_out, folded into the pmean matmul
        # (mean commutes with the linear x*l contraction, so it is hoisted).
        lbar = jnp.dot(lsoft, pmean, preferred_element_type=f32)   # (V, ll)

        # q_n[v, c] = sum_t xd[n, c, v, t] * lbar[v, t]
        prod = xd_n * jnp.concatenate([lbar] * cin, axis=1)        # (V, cl)
        q_n = jnp.dot(prod, gsum, preferred_element_type=f32)      # (V, cin)

        # attention: contract the channel axis of q_n with itself (no .T)
        att = jax.lax.dot_general(q_n, q_n, (((1,), (1,)), ((), ())),
                                  preferred_element_type=f32) * norm   # (V, V)
        att = jnp.maximum(att, 0.0)
        ea = jnp.exp(att - jnp.max(att, axis=1, keepdims=True))
        adp = ea * pl.reciprocal(jnp.sum(ea, axis=1, keepdims=True), approx=True)

        # out[n, c, w, t] = sum_v adp[v, w] * xd[n, c, v, t]
        outs.append(jax.lax.dot_general(adp, xd_n, (((0,), (0,)), ((), ())),
                                        preferred_element_type=f32))   # (V, cl)

    res = outs[0] if nb == 1 else jnp.concatenate(outs, axis=1)        # (V, nb*cl)
    # TODO(synk): F.dropout is identity in eval mode; training-mode RNG dropout
    # is not implemented in-kernel.
    o_ref[...] = res.astype(o_ref.dtype)                               # one unmasked, lane-dense store


def _normalize_adj(adj):
    """Dif_cov.normalization: diag(1/deg) @ (adj + I), with 1/0 -> 0."""
    a = adj + jnp.eye(adj.shape[0], dtype=adj.dtype)
    deg = jnp.sum(a, axis=1)
    d_inv = jnp.where(deg > 0, 1.0 / deg, 0.0)
    return d_inv[:, None] * a


def _pick_batch_block(n, cl, v, itemsize, target_bytes=2 << 20):
    """Pick nb | n so the (V, nb*cl) block is lane-legal and ~<= target bytes.

    Lane-legal: nb*cl % 128 == 0, or nb == n (block == full array).  The block
    is lane-dense (no 128/L padding factor), so raw bytes == VMEM bytes; with
    double-buffered input + output the 2 MiB target stays inside the scoped
    VMEM default on v5e/v6e/v7x.  Prefer >=2 grid steps when possible
    (pipelining + v7x megacore sharding of the "parallel" axis).
    """
    valid = [d for d in range(1, n + 1)
             if n % d == 0 and (d == n or (d * cl) % 128 == 0)]
    within = [d for d in valid if d * cl * v * itemsize <= target_bytes]
    if not within:
        return min(valid)
    multi = [d for d in within if n // d >= 2]
    return max(multi) if multi else max(within)


def spatial_block(x, adj, conv_weight, conv_bias):
    """x: (N, C_in, V, L) NCHW.  adj: (V, V).  conv_weight: (C_out, C_in, 1, 1).  conv_bias: (C_out,)."""
    N, C_in, V, L = x.shape
    C_out = conv_weight.shape[0]
    norm = 1.0 / sqrt(C_in)
    cl = C_in * L

    # ---- init-time / parameter-only precompute (no x traffic) ----
    adjt = _normalize_adj(adj.astype(jnp.float32)).T                  # (V, V) = adj_one^T
    w = conv_weight.reshape(C_out, C_in).astype(jnp.float32)
    eye_l = jnp.eye(L, dtype=jnp.float32)
    wbig = jnp.kron(w.T, eye_l)                                       # (C_in*L, C_out*L)
    bias = jnp.repeat(conv_bias.astype(jnp.float32), L).reshape(1, C_out * L)
    bsum = jnp.kron(jnp.eye(C_out, dtype=jnp.float32),
                    jnp.ones((L, L), jnp.float32))                    # (C_out*L, C_out*L)
    pmean = jnp.tile(eye_l, (C_out, 1)) / C_out                       # (C_out*L, L)
    gsum = jnp.kron(jnp.eye(C_in, dtype=jnp.float32),
                    jnp.ones((L, 1), jnp.float32))                    # (C_in*L, C_in)

    # ---- layout plumbing: lane-dense (V, N*C_in*L) working layout ----
    x_t = jnp.transpose(x, (2, 0, 1, 3)).reshape(V, N * cl)

    nb = _pick_batch_block(N, cl, V, x.dtype.itemsize)
    kernel = functools.partial(_spatial_block_kernel,
                               nb=nb, cin=C_in, ll=L, norm=norm)
    out_t = pl.pallas_call(
        kernel,
        out_shape=jax.ShapeDtypeStruct((V, N * cl), x.dtype),
        grid=(N // nb,),
        in_specs=[
            pl.BlockSpec((V, nb * cl), lambda i: (0, i)),
            pl.BlockSpec((V, V), lambda i: (0, 0)),
            pl.BlockSpec(wbig.shape, lambda i: (0, 0)),
            pl.BlockSpec(bias.shape, lambda i: (0, 0)),
            pl.BlockSpec(bsum.shape, lambda i: (0, 0)),
            pl.BlockSpec(pmean.shape, lambda i: (0, 0)),
            pl.BlockSpec(gsum.shape, lambda i: (0, 0)),
        ],
        out_specs=pl.BlockSpec((V, nb * cl), lambda i: (0, i)),
        compiler_params=pltpu.CompilerParams(
            dimension_semantics=("parallel",)),
    )(x_t, adjt, wbig, bias, bsum, pmean, gsum)

    # back to NCHW
    return jnp.transpose(out_t.reshape(V, N, C_in, L), (1, 2, 0, 3))


def _reference(x, adj, conv_weight, conv_bias):
    """Pure-JAX reference mirroring the PyTorch spatial_block forward (eval mode)."""
    N, C_in, V, L = x.shape
    C_out = conv_weight.shape[0]
    norm = 1.0 / sqrt(C_in)
    hi = jax.lax.Precision.HIGHEST
    adj_one = _normalize_adj(adj.astype(jnp.float32))
    xd = jnp.einsum('ncvl,vw->ncwl', x, adj_one, precision=hi)
    w = conv_weight.reshape(C_out, C_in)
    l = jnp.einsum('qc,ncvt->nqvt', w, xd, precision=hi) + conv_bias[None, :, None, None]
    l = jax.nn.softmax(l, axis=3)
    x1 = jnp.einsum('ncvt,nqvt->ncqv', xd, l, precision=hi)
    q_n = jnp.mean(x1, axis=2)                            # (N, C_in, V)
    att = jnp.einsum('ncv,ncw->nvw', q_n, q_n, precision=hi) * norm
    adp = jax.nn.softmax(jax.nn.relu(att), axis=2)
    return jnp.einsum('ncvl,nvw->ncwl', xd, adp, precision=hi)


if __name__ == "__main__":
    # small shapes consistent with the module: N=2, hid_dim(C_in)=4, emb_dim(C_out)=8, V=16, L=16
    N, C_in, C_out, V, L = 2, 4, 8, 16, 16

    key = jax.random.PRNGKey(0)
    kx, kw, kb, ka = jax.random.split(key, 4)
    x = jax.random.normal(kx, (N, C_in, V, L), dtype=jnp.float32)
    # synthetic symmetric 0/1 adjacency (Dif_cov input)
    adj = (jax.random.uniform(ka, (V, V)) > 0.5).astype(jnp.float32)
    adj = jnp.maximum(adj, adj.T)
    # deterministic synthetic Conv2d(C_in, C_out, 1) parameters
    bound = 1.0 / sqrt(C_in)
    conv_weight = jax.random.uniform(kw, (C_out, C_in, 1, 1), jnp.float32, -bound, bound)
    conv_bias = jax.random.uniform(kb, (C_out,), jnp.float32, -bound, bound)

    out = jax.block_until_ready(spatial_block(x, adj, conv_weight, conv_bias))
    ref = jax.block_until_ready(_reference(x, adj, conv_weight, conv_bias))

    assert out.shape == (N, C_in, V, L), out.shape
    # default-precision MXU (bf16 operand passes, f32 accumulate) per the perf
    # guidance => compare against the HIGHEST-precision reference at 1e-2.
    err = float(jnp.max(jnp.abs(out - ref)))
    assert jnp.allclose(out, ref, atol=1e-2, rtol=1e-2), err

    print("KERNEL_OK")
</pallas_src>

<mosaic_0001>
module attributes {stable_mosaic.version = 11 : i64} {
  func.func @_spatial_block_kernel(%arg0: i32, %arg1: memref<16x128xf32, #tpu.memory_space<vmem>>, %arg2: memref<16x16xf32, #tpu.memory_space<vmem>>, %arg3: memref<64x128xf32, #tpu.memory_space<vmem>>, %arg4: memref<1x128xf32, #tpu.memory_space<vmem>>, %arg5: memref<128x128xf32, #tpu.memory_space<vmem>>, %arg6: memref<128x16xf32, #tpu.memory_space<vmem>>, %arg7: memref<64x4xf32, #tpu.memory_space<vmem>>, %arg8: memref<16x128xf32, #tpu.memory_space<vmem>>) attributes {dimension_semantics = [#tpu.dimension_semantics<parallel>], iteration_bounds = array<i64: 1>, scalar_prefetch = 0 : i64, scratch_operands = 0 : i64, tpu.core_type = #tpu.core_type<tc>, window_params = [{transform_indices = @transform_0, window_bounds = array<i64: 16, 128>}, {pipeline_mode = #tpu.pipeline_mode<synchronous>, transform_indices = @transform_1, window_bounds = array<i64: 16, 16>}, {pipeline_mode = #tpu.pipeline_mode<synchronous>, transform_indices = @transform_2, window_bounds = array<i64: 64, 128>}, {pipeline_mode = #tpu.pipeline_mode<synchronous>, transform_indices = @transform_3, window_bounds = array<i64: 1, 128>}, {pipeline_mode = #tpu.pipeline_mode<synchronous>, transform_indices = @transform_4, window_bounds = array<i64: 128, 128>}, {pipeline_mode = #tpu.pipeline_mode<synchronous>, transform_indices = @transform_5, window_bounds = array<i64: 128, 16>}, {pipeline_mode = #tpu.pipeline_mode<synchronous>, transform_indices = @transform_6, window_bounds = array<i64: 64, 4>}, {transform_indices = @transform_7, window_bounds = array<i64: 16, 128>}]} {
    %c0 = arith.constant 0 : index
    %c0_0 = arith.constant 0 : index
    %0 = vector.load %arg1[%c0, %c0_0] : memref<16x128xf32, #tpu.memory_space<vmem>>, vector<16x128xf32>
    %c0_1 = arith.constant 0 : index
    %c0_2 = arith.constant 0 : index
    %1 = vector.load %arg2[%c0_1, %c0_2] : memref<16x16xf32, #tpu.memory_space<vmem>>, vector<16x16xf32>
    %c0_3 = arith.constant 0 : index
    %c0_4 = arith.constant 0 : index
    %2 = vector.load %arg3[%c0_3, %c0_4] : memref<64x128xf32, #tpu.memory_space<vmem>>, vector<64x128xf32>
    %c0_5 = arith.constant 0 : index
    %c0_6 = arith.constant 0 : index
    %3 = vector.load %arg4[%c0_5, %c0_6] : memref<1x128xf32, #tpu.memory_space<vmem>>, vector<1x128xf32>
    %c0_7 = arith.constant 0 : index
    %c0_8 = arith.constant 0 : index
    %4 = vector.load %arg5[%c0_7, %c0_8] : memref<128x128xf32, #tpu.memory_space<vmem>>, vector<128x128xf32>
    %c0_9 = arith.constant 0 : index
    %c0_10 = arith.constant 0 : index
    %5 = vector.load %arg6[%c0_9, %c0_10] : memref<128x16xf32, #tpu.memory_space<vmem>>, vector<128x16xf32>
    %c0_11 = arith.constant 0 : index
    %c0_12 = arith.constant 0 : index
    %6 = vector.load %arg7[%c0_11, %c0_12] : memref<64x4xf32, #tpu.memory_space<vmem>>, vector<64x4xf32>
    %cst = arith.constant dense<0.000000e+00> : vector<16x128xf32>
    %7 = tpu.matmul %1, %0, %cst {dimension_numbers = #tpu.dot_dimension_numbers<[1], [0], [0], [1], [0, 0, 1, 1], [], []>} : vector<16x16xf32>, vector<16x128xf32>, vector<16x128xf32> -> vector<16x128xf32>
    %8 = vector.extract_strided_slice %7 {offsets = [0, 0], sizes = [16, 64], strides = [1, 1]} : vector<16x128xf32> to vector<16x64xf32>
    %cst_13 = arith.constant dense<0.000000e+00> : vector<16x128xf32>
    %9 = tpu.matmul %8, %2, %cst_13 {dimension_numbers = #tpu.dot_dimension_numbers<[1], [0], [0], [1], [0, 0, 1, 1], [], []>} : vector<16x64xf32>, vector<64x128xf32>, vector<16x128xf32> -> vector<16x128xf32>
    %10 = vector.broadcast %3 : vector<1x128xf32> to vector<16x128xf32>
    %11 = arith.addf %9, %10 : vector<16x128xf32>
    %cst_14 = arith.constant dense<0xFF800000> : vector<16xf32>
    %12 = vector.multi_reduction <maximumf>, %11, %cst_14 [1] : vector<16x128xf32> to vector<16xf32>
    %13 = vector.shape_cast %12 : vector<16xf32> to vector<16x1xf32>
    %14 = vector.broadcast %13 : vector<16x1xf32> to vector<16x128xf32>
    %15 = arith.subf %11, %14 : vector<16x128xf32>
    %16 = math.exp %15 : vector<16x128xf32>
    %cst_15 = arith.constant dense<0.000000e+00> : vector<16x128xf32>
    %17 = tpu.matmul %16, %4, %cst_15 {dimension_numbers = #tpu.dot_dimension_numbers<[1], [0], [0], [1], [0, 0, 1, 1], [], []>} : vector<16x128xf32>, vector<128x128xf32>, vector<16x128xf32> -> vector<16x128xf32>
    %18 = tpu.reciprocal %17 {approx = true} : vector<16x128xf32> -> vector<16x128xf32>
    %19 = arith.mulf %16, %18 : vector<16x128xf32>
    %cst_16 = arith.constant dense<0.000000e+00> : vector<16x16xf32>
    %20 = tpu.matmul %19, %5, %cst_16 {dimension_numbers = #tpu.dot_dimension_numbers<[1], [0], [0], [1], [0, 0, 1, 1], [], []>} : vector<16x128xf32>, vector<128x16xf32>, vector<16x16xf32> -> vector<16x16xf32>
    %21 = tpu.concatenate %20, %20, %20, %20 in 1 : vector<16x16xf32>, vector<16x16xf32>, vector<16x16xf32>, vector<16x16xf32> -> vector<16x64xf32>
    %22 = arith.mulf %8, %21 : vector<16x64xf32>
    %cst_17 = arith.constant dense<0.000000e+00> : vector<16x4xf32>
    %23 = tpu.matmul %22, %6, %cst_17 {dimension_numbers = #tpu.dot_dimension_numbers<[1], [0], [0], [1], [0, 0, 1, 1], [], []>} : vector<16x64xf32>, vector<64x4xf32>, vector<16x4xf32> -> vector<16x4xf32>
    %cst_18 = arith.constant dense<0.000000e+00> : vector<16x16xf32>
    %24 = tpu.matmul %23, %23, %cst_18 {dimension_numbers = #tpu.dot_dimension_numbers<[1], [1], [0], [0], [0, 0, 1, 0], [], []>} : vector<16x4xf32>, vector<16x4xf32>, vector<16x16xf32> -> vector<16x16xf32>
    %cst_19 = arith.constant 5.000000e-01 : f32
    %25 = vector.broadcast %cst_19 : f32 to vector<16x16xf32>
    %26 = arith.mulf %24, %25 : vector<16x16xf32>
    %cst_20 = arith.constant 0.000000e+00 : f32
    %27 = vector.broadcast %cst_20 : f32 to vector<16x16xf32>
    %28 = arith.maximumf %26, %27 : vector<16x16xf32>
    %cst_21 = arith.constant dense<0xFF800000> : vector<16xf32>
    %29 = vector.multi_reduction <maximumf>, %28, %cst_21 [1] : vector<16x16xf32> to vector<16xf32>
    %30 = vector.shape_cast %29 : vector<16xf32> to vector<16x1xf32>
    %31 = vector.broadcast %30 : vector<16x1xf32> to vector<16x16xf32>
    %32 = arith.subf %28, %31 : vector<16x16xf32>
    %33 = math.exp %32 : vector<16x16xf32>
    %cst_22 = arith.constant dense<0.000000e+00> : vector<16xf32>
    %34 = vector.multi_reduction <add>, %33, %cst_22 [1] : vector<16x16xf32> to vector<16xf32>
    %35 = vector.shape_cast %34 : vector<16xf32> to vector<16x1xf32>
    %36 = tpu.reciprocal %35 {approx = true} : vector<16x1xf32> -> vector<16x1xf32>
    %37 = vector.broadcast %36 : vector<16x1xf32> to vector<16x16xf32>
    %38 = arith.mulf %33, %37 : vector<16x16xf32>
    %cst_23 = arith.constant dense<0.000000e+00> : vector<16x64xf32>
    %39 = tpu.matmul %38, %8, %cst_23 {dimension_numbers = #tpu.dot_dimension_numbers<[0], [0], [1], [1], [0, 1, 1, 1], [], []>} : vector<16x16xf32>, vector<16x64xf32>, vector<16x64xf32> -> vector<16x64xf32>
    %40 = vector.extract_strided_slice %7 {offsets = [0, 64], sizes = [16, 64], strides = [1, 1]} : vector<16x128xf32> to vector<16x64xf32>
    %cst_24 = arith.constant dense<0.000000e+00> : vector<16x128xf32>
    %41 = tpu.matmul %40, %2, %cst_24 {dimension_numbers = #tpu.dot_dimension_numbers<[1], [0], [0], [1], [0, 0, 1, 1], [], []>} : vector<16x64xf32>, vector<64x128xf32>, vector<16x128xf32> -> vector<16x128xf32>
    %42 = vector.broadcast %3 : vector<1x128xf32> to vector<16x128xf32>
    %43 = arith.addf %41, %42 : vector<16x128xf32>
    %cst_25 = arith.constant dense<0xFF800000> : vector<16xf32>
    %44 = vector.multi_reduction <maximumf>, %43, %cst_25 [1] : vector<16x128xf32> to vector<16xf32>
    %45 = vector.shape_cast %44 : vector<16xf32> to vector<16x1xf32>
    %46 = vector.broadcast %45 : vector<16x1xf32> to vector<16x128xf32>
    %47 = arith.subf %43, %46 : vector<16x128xf32>
    %48 = math.exp %47 : vector<16x128xf32>
    %cst_26 = arith.constant dense<0.000000e+00> : vector<16x128xf32>
    %49 = tpu.matmul %48, %4, %cst_26 {dimension_numbers = #tpu.dot_dimension_numbers<[1], [0], [0], [1], [0, 0, 1, 1], [], []>} : vector<16x128xf32>, vector<128x128xf32>, vector<16x128xf32> -> vector<16x128xf32>
    %50 = tpu.reciprocal %49 {approx = true} : vector<16x128xf32> -> vector<16x128xf32>
    %51 = arith.mulf %48, %50 : vector<16x128xf32>
    %cst_27 = arith.constant dense<0.000000e+00> : vector<16x16xf32>
    %52 = tpu.matmul %51, %5, %cst_27 {dimension_numbers = #tpu.dot_dimension_numbers<[1], [0], [0], [1], [0, 0, 1, 1], [], []>} : vector<16x128xf32>, vector<128x16xf32>, vector<16x16xf32> -> vector<16x16xf32>
    %53 = tpu.concatenate %52, %52, %52, %52 in 1 : vector<16x16xf32>, vector<16x16xf32>, vector<16x16xf32>, vector<16x16xf32> -> vector<16x64xf32>
    %54 = arith.mulf %40, %53 : vector<16x64xf32>
    %cst_28 = arith.constant dense<0.000000e+00> : vector<16x4xf32>
    %55 = tpu.matmul %54, %6, %cst_28 {dimension_numbers = #tpu.dot_dimension_numbers<[1], [0], [0], [1], [0, 0, 1, 1], [], []>} : vector<16x64xf32>, vector<64x4xf32>, vector<16x4xf32> -> vector<16x4xf32>
    %cst_29 = arith.constant dense<0.000000e+00> : vector<16x16xf32>
    %56 = tpu.matmul %55, %55, %cst_29 {dimension_numbers = #tpu.dot_dimension_numbers<[1], [1], [0], [0], [0, 0, 1, 0], [], []>} : vector<16x4xf32>, vector<16x4xf32>, vector<16x16xf32> -> vector<16x16xf32>
    %cst_30 = arith.constant 5.000000e-01 : f32
    %57 = vector.broadcast %cst_30 : f32 to vector<16x16xf32>
    %58 = arith.mulf %56, %57 : vector<16x16xf32>
    %cst_31 = arith.constant 0.000000e+00 : f32
    %59 = vector.broadcast %cst_31 : f32 to vector<16x16xf32>
    %60 = arith.maximumf %58, %59 : vector<16x16xf32>
    %cst_32 = arith.constant dense<0xFF800000> : vector<16xf32>
    %61 = vector.multi_reduction <maximumf>, %60, %cst_32 [1] : vector<16x16xf32> to vector<16xf32>
    %62 = vector.shape_cast %61 : vector<16xf32> to vector<16x1xf32>
    %63 = vector.broadcast %62 : vector<16x1xf32> to vector<16x16xf32>
    %64 = arith.subf %60, %63 : vector<16x16xf32>
    %65 = math.exp %64 : vector<16x16xf32>
    %cst_33 = arith.constant dense<0.000000e+00> : vector<16xf32>
    %66 = vector.multi_reduction <add>, %65, %cst_33 [1] : vector<16x16xf32> to vector<16xf32>
    %67 = vector.shape_cast %66 : vector<16xf32> to vector<16x1xf32>
    %68 = tpu.reciprocal %67 {approx = true} : vector<16x1xf32> -> vector<16x1xf32>
    %69 = vector.broadcast %68 : vector<16x1xf32> to vector<16x16xf32>
    %70 = arith.mulf %65, %69 : vector<16x16xf32>
    %cst_34 = arith.constant dense<0.000000e+00> : vector<16x64xf32>
    %71 = tpu.matmul %70, %40, %cst_34 {dimension_numbers = #tpu.dot_dimension_numbers<[0], [0], [1], [1], [0, 1, 1, 1], [], []>} : vector<16x16xf32>, vector<16x64xf32>, vector<16x64xf32> -> vector<16x64xf32>
    %72 = tpu.concatenate %39, %71 in 1 : vector<16x64xf32>, vector<16x64xf32> -> vector<16x128xf32>
    %c0_35 = arith.constant 0 : index
    %c0_36 = arith.constant 0 : index
    %73 = vector.load %arg8[%c0_35, %c0_36] : memref<16x128xf32, #tpu.memory_space<vmem>>, vector<16x128xf32>
    tpu.vector_store %arg8[%c0_35, %c0_36], %72 {strides = array<i32>} : memref<16x128xf32, #tpu.memory_space<vmem>>, vector<16x128xf32>,
    return
  }
  func.func @transform_0(%arg0: i32) -> (i32, i32) {
    %c0_i32 = arith.constant 0 : i32
    %c0_i32_0 = arith.constant 0 : i32
    return %c0_i32, %arg0 : i32, i32
  }
  func.func @transform_1(%arg0: i32) -> (i32, i32) {
    %c0_i32 = arith.constant 0 : i32
    %c0_i32_0 = arith.constant 0 : i32
    %c0_i32_1 = arith.constant 0 : i32
    return %c0_i32, %c0_i32_0 : i32, i32
  }
  func.func @transform_2(%arg0: i32) -> (i32, i32) {
    %c0_i32 = arith.constant 0 : i32
    %c0_i32_0 = arith.constant 0 : i32
    %c0_i32_1 = arith.constant 0 : i32
    return %c0_i32, %c0_i32_0 : i32, i32
  }
  func.func @transform_3(%arg0: i32) -> (i32, i32) {
    %c0_i32 = arith.constant 0 : i32
    %c0_i32_0 = arith.constant 0 : i32
    %c0_i32_1 = arith.constant 0 : i32
    return %c0_i32, %c0_i32_0 : i32, i32
  }
  func.func @transform_4(%arg0: i32) -> (i32, i32) {
    %c0_i32 = arith.constant 0 : i32
    %c0_i32_0 = arith.constant 0 : i32
    %c0_i32_1 = arith.constant 0 : i32
    return %c0_i32, %c0_i32_0 : i32, i32
  }
  func.func @transform_5(%arg0: i32) -> (i32, i32) {
    %c0_i32 = arith.constant 0 : i32
    %c0_i32_0 = arith.constant 0 : i32
    %c0_i32_1 = arith.constant 0 : i32
    return %c0_i32, %c0_i32_0 : i32, i32
  }
  func.func @transform_6(%arg0: i32) -> (i32, i32) {
    %c0_i32 = arith.constant 0 : i32
    %c0_i32_0 = arith.constant 0 : i32
    %c0_i32_1 = arith.constant 0 : i32
    return %c0_i32, %c0_i32_0 : i32, i32
  }
  func.func @transform_7(%arg0: i32) -> (i32, i32) {
    %c0_i32 = arith.constant 0 : i32
    %c0_i32_0 = arith.constant 0 : i32
    return %c0_i32, %arg0 : i32, i32
  }
}

</mosaic_0001>

<llo_original>
// kernel: tpu_custom_call.1
$region0: #{tpu_custom_call.1}
  #allocation0 [shape = 'u32[]', space=smem, size = 0x4, offset = 0x4, fixed_abs, tag = 'smem constant byte address 0x4 - core index']
  #allocation1 [shape = 'u32[144,128]{1,0:T(1,128)}', space=vmem, size = 0x12000, scoped, tag = 'internal scratch']
  %s0 = inlined_call_operand.vmem [shape: f32[16,128], index: 0, kind: input, shape index: {}]
  %s1 = inlined_call_operand.vmem [shape: f32[16,16], index: 1, kind: input, shape index: {}]
  %s2 = inlined_call_operand.vmem [shape: f32[64,128], index: 2, kind: input, shape index: {}]
  %s3 = inlined_call_operand.vmem [shape: f32[1,128], index: 3, kind: input, shape index: {}]
  %s4 = inlined_call_operand.vmem [shape: f32[128,128], index: 4, kind: input, shape index: {}]
  %s5 = inlined_call_operand.vmem [shape: f32[128,16], index: 5, kind: input, shape index: {}]
  %s6 = inlined_call_operand.vmem [shape: f32[64,4], index: 6, kind: input, shape index: {}]
  %s7 = inlined_call_operand.hbm [shape: f32[16,128], index: 7, kind: output, shape index: {}]
  %s8 = sld [smem:[#allocation0]]
  $region38: #{tpu_custom_call.1} parent=0
    _
  %s10 = ssub.s32 1, %s8
  %s11 = scalar_select 0, %s10, %s8
  $region1: #{tpu_custom_call.1} parent=0
    #allocation2 [shape = 'u8[8192]{0}', space=vmem, size = 0x2000, scoped, tag = 'output window, operand 0, single buffered']
    #allocation3 [shape = 's32[1]{0}', space=sflag, size = 0x4, scoped, tag = 'scoped memory for tpu_custom_call.1']
    %12 = vsyncpa [#allocation3], 0
    // Predicated region
    $region2: #{tpu_custom_call.1} parent=1 // pred_check
      _
    $region3: #{tpu_custom_call.1} parent=1 // pred_check_branch
      %14 = sbr.rel (0) target = $region5
    $region4: #{tpu_custom_call.1} parent=1 // pred_region
      _
    $region5: #{tpu_custom_call.1} parent=1 // pred_fallthru
      _
    // Predicated region
    $region6: #{tpu_custom_call.1} parent=1 // pred_check
      _
    $region7: #{tpu_custom_call.1} parent=1 // pred_check_branch
      %16 = sbr.rel (0) target = $region9
    $region8: #{tpu_custom_call.1} parent=1 // pred_region
      _
    $region9: #{tpu_custom_call.1} parent=1 // pred_fallthru
      _
    // Predicated region
    $region10: #{tpu_custom_call.1} parent=1 // pred_check
      _
    $region11: #{tpu_custom_call.1} parent=1 // pred_check_branch
      %18 = sbr.rel (0) target = $region13
    $region12: #{tpu_custom_call.1} parent=1 // pred_region
      _
    $region13: #{tpu_custom_call.1} parent=1 // pred_fallthru
      _
    // Predicated region
    $region14: #{tpu_custom_call.1} parent=1 // pred_check
      _
    $region15: #{tpu_custom_call.1} parent=1 // pred_check_branch
      %20 = sbr.rel (0) target = $region17
    $region16: #{tpu_custom_call.1} parent=1 // pred_region
      _
    $region17: #{tpu_custom_call.1} parent=1 // pred_fallthru
      _
    // Predicated region
    $region18: #{tpu_custom_call.1} parent=1 // pred_check
      _
    $region19: #{tpu_custom_call.1} parent=1 // pred_check_branch
      %22 = sbr.rel (0) target = $region21
    $region20: #{tpu_custom_call.1} parent=1 // pred_region
      _
    $region21: #{tpu_custom_call.1} parent=1 // pred_fallthru
      _
    // Predicated region
    $region22: #{tpu_custom_call.1} parent=1 // pred_check
      _
    $region23: #{tpu_custom_call.1} parent=1 // pred_check_branch
      %24 = sbr.rel (0) target = $region25
    $region24: #{tpu_custom_call.1} parent=1 // pred_region
      _
    $region25: #{tpu_custom_call.1} parent=1 // pred_fallthru
      _
    // Predicated region
    $region26: #{tpu_custom_call.1} parent=1 // pred_check
      _
    $region27: #{tpu_custom_call.1} parent=1 // pred_check_branch
      %26 = sbr.rel (0) target = $region29
    $region28: #{tpu_custom_call.1} parent=1 // pred_region
      _
    $region29: #{tpu_custom_call.1} parent=1 // pred_fallthru
      _
    %v27 = vld [vmem:[%s0] sm:$0xff]
    %v28 = vld [vmem:[%s0 + $0x8] sm:$0xff]
    %v29 = vld [vmem:[%s1] sm:$0xff]
    %v30 = vld [vmem:[%s1 + $0x8] sm:$0xff]
    %v31 = vld [vmem:[%s2] sm:$0xff]
    %v32 = vld [vmem:[%s2 + $0x8] sm:$0xff]
    %v33 = vld [vmem:[%s2 + $0x10] sm:$0xff]
    %v34 = vld [vmem:[%s2 + $0x18] sm:$0xff]
    %v35 = vld [vmem:[%s2 + $0x20] sm:$0xff]
    %v36 = vld [vmem:[%s2 + $0x28] sm:$0xff]
    %v37 = vld [vmem:[%s2 + $0x30] sm:$0xff]
    %v38 = vld [vmem:[%s2 + $0x38] sm:$0xff]
    %v39 = vld [vmem:[%s3] sm:$0x1]
    %v40 = vld [vmem:[%s4] sm:$0xff]
    %v41 = vld [vmem:[%s4 + $0x8] sm:$0xff]
    %v42 = vld [vmem:[%s4 + $0x10] sm:$0xff]
    %v43 = vld [vmem:[%s4 + $0x18] sm:$0xff]
    %v44 = vld [vmem:[%s4 + $0x20] sm:$0xff]
    %v45 = vld [vmem:[%s4 + $0x28] sm:$0xff]
    %v46 = vld [vmem:[%s4 + $0x30] sm:$0xff]
    %v47 = vld [vmem:[%s4 + $0x38] sm:$0xff]
    %v48 = vld [vmem:[%s4 + $0x40] sm:$0xff]
    %v49 = vld [vmem:[%s4 + $0x48] sm:$0xff]
    %v50 = vld [vmem:[%s4 + $0x50] sm:$0xff]
    %v51 = vld [vmem:[%s4 + $0x58] sm:$0xff]
    %v52 = vld [vmem:[%s4 + $0x60] sm:$0xff]
    %v53 = vld [vmem:[%s4 + $0x68] sm:$0xff]
    %v54 = vld [vmem:[%s4 + $0x70] sm:$0xff]
    %v55 = vld [vmem:[%s4 + $0x78] sm:$0xff]
    %v56 = vld [vmem:[%s5] sm:$0xff]
    %v57 = vld [vmem:[%s5 + $0x8] sm:$0xff]
    %v58 = vld [vmem:[%s5 + $0x10] sm:$0xff]
    %v59 = vld [vmem:[%s5 + $0x18] sm:$0xff]
    %v60 = vld [vmem:[%s5 + $0x20] sm:$0xff]
    %v61 = vld [vmem:[%s5 + $0x28] sm:$0xff]
    %v62 = vld [vmem:[%s5 + $0x30] sm:$0xff]
    %v63 = vld [vmem:[%s5 + $0x38] sm:$0xff]
    %v64 = vld [vmem:[%s5 + $0x40] sm:$0xff]
    %v65 = vld [vmem:[%s5 + $0x48] sm:$0xff]
    %v66 = vld [vmem:[%s5 + $0x50] sm:$0xff]
    %v67 = vld [vmem:[%s5 + $0x58] sm:$0xff]
    %v68 = vld [vmem:[%s5 + $0x60] sm:$0xff]
    %v69 = vld [vmem:[%s5 + $0x68] sm:$0xff]
    %v70 = vld [vmem:[%s5 + $0x70] sm:$0xff]
    %v71 = vld [vmem:[%s5 + $0x78] sm:$0xff]
    %v72 = vld [vmem:[%s6] sm:$0xff]
    %v73 = vld [vmem:[%s6 + $0x8] sm:$0xff]
    %v74 = vld [vmem:[%s6 + $0x10] sm:$0xff]
    %v75 = vld [vmem:[%s6 + $0x18] sm:$0xff]
    %v76 = vld [vmem:[%s6 + $0x20] sm:$0xff]
    %v77 = vld [vmem:[%s6 + $0x28] sm:$0xff]
    %v78 = vld [vmem:[%s6 + $0x30] sm:$0xff]
    %v79 = vld [vmem:[%s6 + $0x38] sm:$0xff]
    %vm80 = vcmask 130048
    %v82 = vsel %vm80, %v29, 0
    %v85 = vsel %vm80, %v30, 0
    %87 = vmatprep.subr.mxu0 0.0
    %88 = vmatpush1.msra.mxu0 %v27
    %89 = vmatprep.subr.mxu0 0.0
    %90 = vmatpush1.msra.mxu0 %v28
    %91 = vmatprep.subr.mxu0 0.0
    %92 = vmatpush1.msra.mxu0 0.0
    %93 = vmatprep.subr.mxu0 0.0
    %94 = vmatpush1.msra.mxu0 0.0
    %95 = vmatprep.subr.mxu0 0.0
    %96 = vmatpush1.msra.mxu0 0.0
    %97 = vmatprep.subr.mxu0 0.0
    %98 = vmatpush1.msra.mxu0 0.0
    %99 = vmatprep.subr.mxu0 0.0
    %100 = vmatpush1.msra.mxu0 0.0
    %101 = vmatprep.subr.mxu0 0.0
    %102 = vmatpush1.msra.mxu0 0.0
    %103 = vmatprep.subr.mxu0 0.0
    %104 = vmatpush1.msra.mxu0 0.0
    %105 = vmatprep.subr.mxu0 0.0
    %106 = vmatpush1.msra.mxu0 0.0
    %107 = vmatprep.subr.mxu0 0.0
    %108 = vmatpush1.msra.mxu0 0.0
    %109 = vmatprep.subr.mxu0 0.0
    %110 = vmatpush1.msra.mxu0 0.0
    %111 = vmatprep.subr.mxu0 0.0
    %112 = vmatpush1.msra.mxu0 0.0
    %113 = vmatprep.subr.mxu0 0.0
    %114 = vmatpush1.msra.mxu0 0.0
    %115 = vmatprep.subr.mxu0 0.0
    %116 = vmatpush1.msra.mxu0 0.0
    %117 = vmatprep.subr.mxu0 0.0
    %118 = vmatpush1.msra.mxu0 0.0
    %119 = vmatprep.subr.mxu0 0.0
    %120 = vmatpush1.msra.mxu0 0.0
    %121 = vmatprep.subr.mxu0 0.0
    %122 = vmatpush1.msra.mxu0 0.0
    %123 = vmatprep.subr.mxu0 0.0
    %124 = vmatpush1.msra.mxu0 0.0
    %125 = vmatprep.subr.mxu0 0.0
    %126 = vmatpush1.msra.mxu0 0.0
    %127 = vmatprep.subr.mxu0 0.0
    %128 = vmatpush1.msra.mxu0 0.0
    %129 = vmatprep.subr.mxu0 0.0
    %130 = vmatpush1.msra.mxu0 0.0
    %131 = vmatprep.subr.mxu0 0.0
    %132 = vmatpush1.msra.mxu0 0.0
    %133 = vmatprep.subr.mxu0 0.0
    %134 = vmatpush1.msra.mxu0 0.0
    %135 = vmatprep.subr.mxu0 0.0
    %136 = vmatpush1.msra.mxu0 0.0
    %137 = vmatprep.subr.mxu0 0.0
    %138 = vmatpush1.msra.mxu0 0.0
    %139 = vmatprep.subr.mxu0 0.0
    %140 = vmatpush1.msra.mxu0 0.0
    %141 = vmatprep.subr.mxu0 0.0
    %142 = vmatpush1.msra.mxu0 0.0
    %143 = vmatprep.subr.mxu0 0.0
    %144 = vmatpush1.msra.mxu0 0.0
    %145 = vmatprep.subr.mxu0 0.0
    %146 = vmatpush1.msra.mxu0 0.0
    %147 = vmatprep.subr.mxu0 0.0
    %148 = vmatpush1.msra.mxu0 0.0
    %149 = vmatprep.subr.mxu0 0.0
    %150 = vmatpush1.msra.mxu0 0.0
    %151 = vmatprep.mubr.f32.mxu0 0.0
    %152 = vmatmul.mubr.f32.gmra.mrb[0].mxu0 %v82
    %v153 = vpop.f32.mrb[0].mxu0
    %v154 = vadd.f32 0.0, %v153
    %v155 = vpop.f32.mrb[0].mxu0
    %156 = vmatprep.mubr.f32.mxu0 0.0
    %157 = vmatmul.mubr.f32.gmra.mrb[0].mxu0 %v85
    %v158 = vpop.f32.mrb[0].mxu0
    %v159 = vadd.f32 0.0, %v158
    %v160 = vpop.f32.mrb[0].mxu0
    %161 = vdwg.mxu0
    %v163 = vlaneseq
    %v164 = vshrl.u32 %v163, 7
    %v165 = vsub.s32 0, %v164
    %v166 = vrot.slane %v39, %v165
    %vm168 = vcmask 523264
    %v170 = vsel %vm168, %v154, 0
    %v173 = vsel %vm168, %v159, 0
    %175 = vmatprep.subr.mxu0 0.0
    %176 = vmatpush1.msra.mxu0 %v31
    %177 = vmatprep.subr.mxu0 0.0
    %178 = vmatpush1.msra.mxu0 %v32
    %179 = vmatprep.subr.mxu0 0.0
    %180 = vmatpush1.msra.mxu0 %v33
    %181 = vmatprep.subr.mxu0 0.0
    %182 = vmatpush1.msra.mxu0 %v34
    %183 = vmatprep.subr.mxu0 0.0
    %184 = vmatpush1.msra.mxu0 %v35
    %185 = vmatprep.subr.mxu0 0.0
    %186 = vmatpush1.msra.mxu0 %v36
    %187 = vmatprep.subr.mxu0 0.0
    %188 = vmatpush1.msra.mxu0 %v37
    %189 = vmatprep.subr.mxu0 0.0
    %190 = vmatpush1.msra.mxu0 %v38
    %191 = vmatprep.subr.mxu0 0.0
    %192 = vmatpush1.msra.mxu0 0.0
    %193 = vmatprep.subr.mxu0 0.0
    %194 = vmatpush1.msra.mxu0 0.0
    %195 = vmatprep.subr.mxu0 0.0
    %196 = vmatpush1.msra.mxu0 0.0
    %197 = vmatprep.subr.mxu0 0.0
    %198 = vmatpush1.msra.mxu0 0.0
    %199 = vmatprep.subr.mxu0 0.0
    %200 = vmatpush1.msra.mxu0 0.0
    %201 = vmatprep.subr.mxu0 0.0
    %202 = vmatpush1.msra.mxu0 0.0
    %203 = vmatprep.subr.mxu0 0.0
    %204 = vmatpush1.msra.mxu0 0.0
    %205 = vmatprep.subr.mxu0 0.0
    %206 = vmatpush1.msra.mxu0 0.0
    %207 = vmatprep.subr.mxu0 0.0
    %208 = vmatpush1.msra.mxu0 0.0
    %209 = vmatprep.subr.mxu0 0.0
    %210 = vmatpush1.msra.mxu0 0.0
    %211 = vmatprep.subr.mxu0 0.0
    %212 = vmatpush1.msra.mxu0 0.0
    %213 = vmatprep.subr.mxu0 0.0
    %214 = vmatpush1.msra.mxu0 0.0
    %215 = vmatprep.subr.mxu0 0.0
    %216 = vmatpush1.msra.mxu0 0.0
    %217 = vmatprep.subr.mxu0 0.0
    %218 = vmatpush1.msra.mxu0 0.0
    %219 = vmatprep.subr.mxu0 0.0
    %220 = vmatpush1.msra.mxu0 0.0
    %221 = vmatprep.subr.mxu0 0.0
    %222 = vmatpush1.msra.mxu0 0.0
    %223 = vmatprep.subr.mxu0 0.0
    %224 = vmatpush1.msra.mxu0 0.0
    %225 = vmatprep.subr.mxu0 0.0
    %226 = vmatpush1.msra.mxu0 0.0
    %227 = vmatprep.subr.mxu0 0.0
    %228 = vmatpush1.msra.mxu0 0.0
    %229 = vmatprep.subr.mxu0 0.0
    %230 = vmatpush1.msra.mxu0 0.0
    %231 = vmatprep.subr.mxu0 0.0
    %232 = vmatpush1.msra.mxu0 0.0
    %233 = vmatprep.subr.mxu0 0.0
    %234 = vmatpush1.msra.mxu0 0.0
    %235 = vmatprep.subr.mxu0 0.0
    %236 = vmatpush1.msra.mxu0 0.0
    %237 = vmatprep.subr.mxu0 0.0
    %238 = vmatpush1.msra.mxu0 0.0
    %239 = vmatprep.mubr.f32.mxu0 0.0
    %240 = vmatmul.mubr.f32.gmra.mrb[0].mxu0 %v170
    %v241 = vpop.f32.mrb[0].mxu0
    %v242 = vadd.f32 %v166, %v241
    %v243 = vpop.f32.mrb[0].mxu0
    %244 = vmatprep.mubr.f32.mxu0 0.0
    %245 = vmatmul.mubr.f32.gmra.mrb[0].mxu0 %v173
    %v246 = vpop.f32.mrb[0].mxu0
    %v247 = vadd.f32 %v166, %v246
    %v248 = vpop.f32.mrb[0].mxu0
    %249 = vdwg.mxu0
    %250 = vmax.xlane.f32.xlu0 %v242
    %v251 = vpop.xlane.xlu0 %250
    %252 = vmax.xlane.f32.xlu0 %v247
    %v253 = vpop.xlane.xlu0 %252
    %v254 = vsub.f32 %v242, %v251
    %v255 = vsub.f32 %v247, %v253
    %v256 = vmul.f32 %v254, 1.442695
    %v257 = vpow.pop %v256
    %v258 = vmul.f32 %v255, 1.442695
    %v259 = vpow.pop %v258
    %260 = vmatprep.subr.mxu0 0.0
    %261 = vmatpush1.msra.mxu0 %v40
    %262 = vmatprep.subr.mxu0 0.0
    %263 = vmatpush1.msra.mxu0 %v41
    %264 = vmatprep.subr.mxu0 0.0
    %265 = vmatpush1.msra.mxu0 %v42
    %266 = vmatprep.subr.mxu0 0.0
    %267 = vmatpush1.msra.mxu0 %v43
    %268 = vmatprep.subr.mxu0 0.0
    %269 = vmatpush1.msra.mxu0 %v44
    %270 = vmatprep.subr.mxu0 0.0
    %271 = vmatpush1.msra.mxu0 %v45
    %272 = vmatprep.subr.mxu0 0.0
    %273 = vmatpush1.msra.mxu0 %v46
    %274 = vmatprep.subr.mxu0 0.0
    %275 = vmatpush1.msra.mxu0 %v47
    %276 = vmatprep.subr.mxu0 0.0
    %277 = vmatpush1.msra.mxu0 %v48
    %278 = vmatprep.subr.mxu0 0.0
    %279 = vmatpush1.msra.mxu0 %v49
    %280 = vmatprep.subr.mxu0 0.0
    %281 = vmatpush1.msra.mxu0 %v50
    %282 = vmatprep.subr.mxu0 0.0
    %283 = vmatpush1.msra.mxu0 %v51
    %284 = vmatprep.subr.mxu0 0.0
    %285 = vmatpush1.msra.mxu0 %v52
    %286 = vmatprep.subr.mxu0 0.0
    %287 = vmatpush1.msra.mxu0 %v53
    %288 = vmatprep.subr.mxu0 0.0
    %289 = vmatpush1.msra.mxu0 %v54
    %290 = vmatprep.subr.mxu0 0.0
    %291 = vmatpush1.msra.mxu0 %v55
    %292 = vmatprep.subr.mxu0 0.0
    %293 = vmatpush1.msra.mxu0 0.0
    %294 = vmatprep.subr.mxu0 0.0
    %295 = vmatpush1.msra.mxu0 0.0
    %296 = vmatprep.subr.mxu0 0.0
    %297 = vmatpush1.msra.mxu0 0.0
    %298 = vmatprep.subr.mxu0 0.0
    %299 = vmatpush1.msra.mxu0 0.0
    %300 = vmatprep.subr.mxu0 0.0
    %301 = vmatpush1.msra.mxu0 0.0
    %302 = vmatprep.subr.mxu0 0.0
    %303 = vmatpush1.msra.mxu0 0.0
    %304 = vmatprep.subr.mxu0 0.0
    %305 = vmatpush1.msra.mxu0 0.0
    %306 = vmatprep.subr.mxu0 0.0
    %307 = vmatpush1.msra.mxu0 0.0
    %308 = vmatprep.subr.mxu0 0.0
    %309 = vmatpush1.msra.mxu0 0.0
    %310 = vmatprep.subr.mxu0 0.0
    %311 = vmatpush1.msra.mxu0 0.0
    %312 = vmatprep.subr.mxu0 0.0
    %313 = vmatpush1.msra.mxu0 0.0
    %314 = vmatprep.subr.mxu0 0.0
    %315 = vmatpush1.msra.mxu0 0.0
    %316 = vmatprep.subr.mxu0 0.0
    %317 = vmatpush1.msra.mxu0 0.0
    %318 = vmatprep.subr.mxu0 0.0
    %319 = vmatpush1.msra.mxu0 0.0
    %320 = vmatprep.subr.mxu0 0.0
    %321 = vmatpush1.msra.mxu0 0.0
    %322 = vmatprep.subr.mxu0 0.0
    %323 = vmatpush1.msra.mxu0 0.0
    %324 = vmatprep.mubr.f32.mxu0 0.0
    %325 = vmatmul.mubr.f32.gmra.mrb[0].mxu0 %v257
    %v326 = vpop.f32.mrb[0].mxu0
    %v327 = vadd.f32 0.0, %v326
    %v328 = vpop.f32.mrb[0].mxu0
    %329 = vmatprep.mubr.f32.mxu0 0.0
    %330 = vmatmul.mubr.f32.gmra.mrb[0].mxu0 %v259
    %v331 = vpop.f32.mrb[0].mxu0
    %v332 = vadd.f32 0.0, %v331
    %v333 = vpop.f32.mrb[0].mxu0
    %334 = vdwg.mxu0
    %v335 = vrcp.pop %v327
    %v336 = vrcp.pop %v332
    %v337 = vmul.f32 %v257, %v335
    %v338 = vmul.f32 %v259, %v336
    %339 = vmatprep.subr.mxu0 0.0
    %340 = vmatpush1.msra.mxu0 %v56
    %341 = vmatprep.subr.mxu0 0.0
    %342 = vmatpush1.msra.mxu0 %v57
    %343 = vmatprep.subr.mxu0 0.0
    %344 = vmatpush1.msra.mxu0 %v58
    %345 = vmatprep.subr.mxu0 0.0
    %346 = vmatpush1.msra.mxu0 %v59
    %347 = vmatprep.subr.mxu0 0.0
    %348 = vmatpush1.msra.mxu0 %v60
    %349 = vmatprep.subr.mxu0 0.0
    %350 = vmatpush1.msra.mxu0 %v61
    %351 = vmatprep.subr.mxu0 0.0
    %352 = vmatpush1.msra.mxu0 %v62
    %353 = vmatprep.subr.mxu0 0.0
    %354 = vmatpush1.msra.mxu0 %v63
    %355 = vmatprep.subr.mxu0 0.0
    %356 = vmatpush1.msra.mxu0 %v64
    %357 = vmatprep.subr.mxu0 0.0
    %358 = vmatpush1.msra.mxu0 %v65
    %359 = vmatprep.subr.mxu0 0.0
    %360 = vmatpush1.msra.mxu0 %v66
    %361 = vmatprep.subr.mxu0 0.0
    %362 = vmatpush1.msra.mxu0 %v67
    %363 = vmatprep.subr.mxu0 0.0
    %364 = vmatpush1.msra.mxu0 %v68
    %365 = vmatprep.subr.mxu0 0.0
    %366 = vmatpush1.msra.mxu0 %v69
    %367 = vmatprep.subr.mxu0 0.0
    %368 = vmatpush1.msra.mxu0 %v70
    %369 = vmatprep.subr.mxu0 0.0
    %370 = vmatpush1.msra.mxu0 %v71
    %371 = vmatprep.subr.mxu0 0.0
    %372 = vmatpush1.msra.mxu0 0.0
    %373 = vmatprep.subr.mxu0 0.0
    %374 = vmatpush1.msra.mxu0 0.0
    %375 = vmatprep.subr.mxu0 0.0
    %376 = vmatpush1.msra.mxu0 0.0
    %377 = vmatprep.subr.mxu0 0.0
    %378 = vmatpush1.msra.mxu0 0.0
    %379 = vmatprep.subr.mxu0 0.0
    %380 = vmatpush1.msra.mxu0 0.0
    %381 = vmatprep.subr.mxu0 0.0
    %382 = vmatpush1.msra.mxu0 0.0
    %383 = vmatprep.subr.mxu0 0.0
    %384 = vmatpush1.msra.mxu0 0.0
    %385 = vmatprep.subr.mxu0 0.0
    %386 = vmatpush1.msra.mxu0 0.0
    %387 = vmatprep.subr.mxu0 0.0
    %388 = vmatpush1.msra.mxu0 0.0
    %389 = vmatprep.subr.mxu0 0.0
    %390 = vmatpush1.msra.mxu0 0.0
    %391 = vmatprep.subr.mxu0 0.0
    %392 = vmatpush1.msra.mxu0 0.0
    %393 = vmatprep.subr.mxu0 0.0
    %394 = vmatpush1.msra.mxu0 0.0
    %395 = vmatprep.subr.mxu0 0.0
    %396 = vmatpush1.msra.mxu0 0.0
    %397 = vmatprep.subr.mxu0 0.0
    %398 = vmatpush1.msra.mxu0 0.0
    %399 = vmatprep.subr.mxu0 0.0
    %400 = vmatpush1.msra.mxu0 0.0
    %401 = vmatprep.subr.mxu0 0.0
    %402 = vmatpush1.msra.mxu0 0.0
    %403 = vmatprep.mubr.f32.mxu0 0.0
    %404 = vmatmul.mubr.f32.gmra.mrb[0].mxu0 %v337
    %v405 = vpop.f32.mrb[0].mxu0
    %v406 = vadd.f32 0.0, %v405
    %v407 = vpop.f32.mrb[0].mxu0
    %408 = vmatprep.mubr.f32.mxu0 0.0
    %409 = vmatmul.mubr.f32.gmra.mrb[0].mxu0 %v338
    %v410 = vpop.f32.mrb[0].mxu0
    %v411 = vadd.f32 0.0, %v410
    %v412 = vpop.f32.mrb[0].mxu0
    %413 = vdwg.mxu0
    %416 = vrot.lane.b32.xlu0 %v406, 16
    %v417 = vpop.permute.xlu0 %416
    %418 = vrot.lane.b32.xlu0 %v411, 16
    %v419 = vpop.permute.xlu0 %418
    %422 = vrot.lane.b32.xlu0 %v406, 32
    %v423 = vpop.permute.xlu0 %422
    %424 = vrot.lane.b32.xlu0 %v411, 32
    %v425 = vpop.permute.xlu0 %424
    %428 = vrot.lane.b32.xlu0 %v406, 48
    %v429 = vpop.permute.xlu0 %428
    %430 = vrot.lane.b32.xlu0 %v411, 48
    %v431 = vpop.permute.xlu0 %430
    %v434 = vsel %vm80, %v406, %v417
    %v435 = vsel %vm80, %v411, %v419
    %vm436 = vcmask 261120
    %v437 = vsel %vm436, %v434, %v423
    %v438 = vsel %vm436, %v435, %v425
    %vm439 = vcmask 392192
    %v440 = vsel %vm439, %v437, %v429
    %v441 = vsel %vm439, %v438, %v431
    %v442 = vmul.f32 %v154, %v440
    %v443 = vmul.f32 %v159, %v441
    %v445 = vsel %vm168, %v442, 0
    %v448 = vsel %vm168, %v443, 0
    %450 = vmatprep.subr.mxu0 0.0
    %451 = vmatpush1.msra.mxu0 %v72
    %452 = vmatprep.subr.mxu0 0.0
    %453 = vmatpush1.msra.mxu0 %v73
    %454 = vmatprep.subr.mxu0 0.0
    %455 = vmatpush1.msra.mxu0 %v74
    %456 = vmatprep.subr.mxu0 0.0
    %457 = vmatpush1.msra.mxu0 %v75
    %458 = vmatprep.subr.mxu0 0.0
    %459 = vmatpush1.msra.mxu0 %v76
    %460 = vmatprep.subr.mxu0 0.0
    %461 = vmatpush1.msra.mxu0 %v77
    %462 = vmatprep.subr.mxu0 0.0
    %463 = vmatpush1.msra.mxu0 %v78
    %464 = vmatprep.subr.mxu0 0.0
    %465 = vmatpush1.msra.mxu0 %v79
    %466 = vmatprep.subr.mxu0 0.0
    %467 = vmatpush1.msra.mxu0 0.0
    %468 = vmatprep.subr.mxu0 0.0
    %469 = vmatpush1.msra.mxu0 0.0
    %470 = vmatprep.subr.mxu0 0.0
    %471 = vmatpush1.msra.mxu0 0.0
    %472 = vmatprep.subr.mxu0 0.0
    %473 = vmatpush1.msra.mxu0 0.0
    %474 = vmatprep.subr.mxu0 0.0
    %475 = vmatpush1.msra.mxu0 0.0
    %476 = vmatprep.subr.mxu0 0.0
    %477 = vmatpush1.msra.mxu0 0.0
    %478 = vmatprep.subr.mxu0 0.0
    %479 = vmatpush1.msra.mxu0 0.0
    %480 = vmatprep.subr.mxu0 0.0
    %481 = vmatpush1.msra.mxu0 0.0
    %482 = vmatprep.subr.mxu0 0.0
    %483 = vmatpush1.msra.mxu0 0.0
    %484 = vmatprep.subr.mxu0 0.0
    %485 = vmatpush1.msra.mxu0 0.0
    %486 = vmatprep.subr.mxu0 0.0
    %487 = vmatpush1.msra.mxu0 0.0
    %488 = vmatprep.subr.mxu0 0.0
    %489 = vmatpush1.msra.mxu0 0.0
    %490 = vmatprep.subr.mxu0 0.0
    %491 = vmatpush1.msra.mxu0 0.0
    %492 = vmatprep.subr.mxu0 0.0
    %493 = vmatpush1.msra.mxu0 0.0
    %494 = vmatprep.subr.mxu0 0.0
    %495 = vmatpush1.msra.mxu0 0.0
    %496 = vmatprep.subr.mxu0 0.0
    %497 = vmatpush1.msra.mxu0 0.0
    %498 = vmatprep.subr.mxu0 0.0
    %499 = vmatpush1.msra.mxu0 0.0
    %500 = vmatprep.subr.mxu0 0.0
    %501 = vmatpush1.msra.mxu0 0.0
    %502 = vmatprep.subr.mxu0 0.0
    %503 = vmatpush1.msra.mxu0 0.0
    %504 = vmatprep.subr.mxu0 0.0
    %505 = vmatpush1.msra.mxu0 0.0
    %506 = vmatprep.subr.mxu0 0.0
    %507 = vmatpush1.msra.mxu0 0.0
    %508 = vmatprep.subr.mxu0 0.0
    %509 = vmatpush1.msra.mxu0 0.0
    %510 = vmatprep.subr.mxu0 0.0
    %511 = vmatpush1.msra.mxu0 0.0
    %512 = vmatprep.subr.mxu0 0.0
    %513 = vmatpush1.msra.mxu0 0.0
    %514 = vmatprep.mubr.f32.mxu0 0.0
    %515 = vmatmul.mubr.f32.gmra.mrb[0].mxu0 %v445
    %v516 = vpop.f32.mrb[0].mxu0
    %v517 = vadd.f32 0.0, %v516
    %v518 = vpop.f32.mrb[0].mxu0
    %519 = vmatprep.mubr.f32.mxu0 0.0
    %520 = vmatmul.mubr.f32.gmra.mrb[0].mxu0 %v448
    %v521 = vpop.f32.mrb[0].mxu0
    %v522 = vadd.f32 0.0, %v521
    %v523 = vpop.f32.mrb[0].mxu0
    %524 = vdwg.mxu0
    %vm525 = vcmask 31744
    %v527 = vsel %vm525, %v517, 0
    %v530 = vsel %vm525, %v522, 0
    %532 = vmatprep.subr.mxu0 0.0
    %533 = vmatpush1.xpose.msra.mxu0 %v527
    %534 = vmatprep.subr.mxu0 0.0
    %535 = vmatpush1.xpose.msra.mxu0 %v530
    %536 = vmatprep.subr.mxu0 0.0
    %537 = vmatpush1.xpose.msra.mxu0 0.0
    %538 = vmatprep.subr.mxu0 0.0
    %539 = vmatpush1.xpose.msra.mxu0 0.0
    %540 = vmatprep.subr.mxu0 0.0
    %541 = vmatpush1.xpose.msra.mxu0 0.0
    %542 = vmatprep.subr.mxu0 0.0
    %543 = vmatpush1.xpose.msra.mxu0 0.0
    %544 = vmatprep.subr.mxu0 0.0
    %545 = vmatpush1.xpose.msra.mxu0 0.0
    %546 = vmatprep.subr.mxu0 0.0
    %547 = vmatpush1.xpose.msra.mxu0 0.0
    %548 = vmatprep.subr.mxu0 0.0
    %549 = vmatpush1.xpose.msra.mxu0 0.0
    %550 = vmatprep.subr.mxu0 0.0
    %551 = vmatpush1.xpose.msra.mxu0 0.0
    %552 = vmatprep.subr.mxu0 0.0
    %553 = vmatpush1.xpose.msra.mxu0 0.0
    %554 = vmatprep.subr.mxu0 0.0
    %555 = vmatpush1.xpose.msra.mxu0 0.0
    %556 = vmatprep.subr.mxu0 0.0
    %557 = vmatpush1.xpose.msra.mxu0 0.0
    %558 = vmatprep.subr.mxu0 0.0
    %559 = vmatpush1.xpose.msra.mxu0 0.0
    %560 = vmatprep.subr.mxu0 0.0
    %561 = vmatpush1.xpose.msra.mxu0 0.0
    %562 = vmatprep.subr.mxu0 0.0
    %563 = vmatpush1.xpose.msra.mxu0 0.0
    %564 = vmatprep.subr.mxu0 0.0
    %565 = vmatpush1.xpose.msra.mxu0 0.0
    %566 = vmatprep.subr.mxu0 0.0
    %567 = vmatpush1.xpose.msra.mxu0 0.0
    %568 = vmatprep.subr.mxu0 0.0
    %569 = vmatpush1.xpose.msra.mxu0 0.0
    %570 = vmatprep.subr.mxu0 0.0
    %571 = vmatpush1.xpose.msra.mxu0 0.0
    %572 = vmatprep.subr.mxu0 0.0
    %573 = vmatpush1.xpose.msra.mxu0 0.0
    %574 = vmatprep.subr.mxu0 0.0
    %575 = vmatpush1.xpose.msra.mxu0 0.0
    %576 = vmatprep.subr.mxu0 0.0
    %577 = vmatpush1.xpose.msra.mxu0 0.0
    %578 = vmatprep.subr.mxu0 0.0
    %579 = vmatpush1.xpose.msra.mxu0 0.0
    %580 = vmatprep.subr.mxu0 0.0
    %581 = vmatpush1.xpose.msra.mxu0 0.0
    %582 = vmatprep.subr.mxu0 0.0
    %583 = vmatpush1.xpose.msra.mxu0 0.0
    %584 = vmatprep.subr.mxu0 0.0
    %585 = vmatpush1.xpose.msra.mxu0 0.0
    %586 = vmatprep.subr.mxu0 0.0
    %587 = vmatpush1.xpose.msra.mxu0 0.0
    %588 = vmatprep.subr.mxu0 0.0
    %589 = vmatpush1.xpose.msra.mxu0 0.0
    %590 = vmatprep.subr.mxu0 0.0
    %591 = vmatpush1.xpose.msra.mxu0 0.0
    %592 = vmatprep.subr.mxu0 0.0
    %593 = vmatpush1.xpose.msra.mxu0 0.0
    %594 = vmatprep.subr.mxu0 0.0
    %595 = vmatpush1.xpose.msra.mxu0 0.0
    %596 = vmatprep.mubr.f32.mxu0 0.0
    %597 = vmatmul.mubr.f32.gmra.mrb[0].mxu0 %v527
    %v598 = vpop.f32.mrb[0].mxu0
    %v599 = vadd.f32 0.0, %v598
    %v600 = vpop.f32.mrb[0].mxu0
    %601 = vmatprep.mubr.f32.mxu0 0.0
    %602 = vmatmul.mubr.f32.gmra.mrb[0].mxu0 %v530
    %v603 = vpop.f32.mrb[0].mxu0
    %v604 = vadd.f32 0.0, %v603
    %v605 = vpop.f32.mrb[0].mxu0
    %606 = vdwg.mxu0
    %v607 = vmul.f32 %v599, 0.5
    %v608 = vmul.f32 %v604, 0.5
    %v609 = vmax.f32 %v607, 0.0
    %v610 = vmax.f32 %v608, 0.0
    %v611 = vsel %vm80, %v609, -inf
    %612 = vmax.xlane.f32.xlu0 %v611
    %v613 = vpop.xlane.xlu0 %612
    %v614 = vsel %vm80, %v610, -inf
    %615 = vmax.xlane.f32.xlu0 %v614
    %v616 = vpop.xlane.xlu0 %615
    %v617 = vsub.f32 %v609, %v613
    %v618 = vsub.f32 %v610, %v616
    %v619 = vmul.f32 %v617, 1.442695
    %v620 = vpow.pop %v619
    %v621 = vmul.f32 %v618, 1.442695
    %v622 = vpow.pop %v621
    %v623 = vsel %vm80, %v620, 0.0
    %624 = vadd.xlane.f32.xlu0 %v623
    %v625 = vpop.xlane.xlu0 %624
    %v626 = vsel %vm80, %v622, 0.0
    %627 = vadd.xlane.f32.xlu0 %v626
    %v628 = vpop.xlane.xlu0 %627
    %v629 = vrcp.pop %v625
    %v630 = vrcp.pop %v628
    %v631 = vmul.f32 %v620, %v629
    %v632 = vmul.f32 %v622, %v630
    %633 = vxpose.xlu0.b32.start [1/16] %v631, 128
    %634 = vxpose.xlu0.b32.cont [2/16] %v632, 128
    %635 = vxpose.xlu0.b32.cont [3/16] 0.0, 128
    %636 = vxpose.xlu0.b32.cont [4/16] 0.0, 128
    %637 = vxpose.xlu0.b32.cont [5/16] 0.0, 128
    %638 = vxpose.xlu0.b32.cont [6/16] 0.0, 128
    %639 = vxpose.xlu0.b32.cont [7/16] 0.0, 128
    %640 = vxpose.xlu0.b32.cont [8/16] 0.0, 128
    %641 = vxpose.xlu0.b32.cont [9/16] 0.0, 128
    %642 = vxpose.xlu0.b32.cont [10/16] 0.0, 128
    %643 = vxpose.xlu0.b32.cont [11/16] 0.0, 128
    %644 = vxpose.xlu0.b32.cont [12/16] 0.0, 128
    %645 = vxpose.xlu0.b32.cont [13/16] 0.0, 128
    %646 = vxpose.xlu0.b32.cont [14/16] 0.0, 128
    %647 = vxpose.xlu0.b32.cont [15/16] 0.0, 128
    %648 = vxpose.xlu0.b32.end [16/16] 0.0, 128
    %v649 = vpop.trf.xlu0
    %v650 = vpop.trf.xlu0
    %v651 = vpop.trf.xlu0
    %v652 = vpop.trf.xlu0
    %v653 = vpop.trf.xlu0
    %v654 = vpop.trf.xlu0
    %v655 = vpop.trf.xlu0
    %v656 = vpop.trf.xlu0
    %v657 = vpop.trf.xlu0
    %v658 = vpop.trf.xlu0
    %v659 = vpop.trf.xlu0
    %v660 = vpop.trf.xlu0
    %v661 = vpop.trf.xlu0
    %v662 = vpop.trf.xlu0
    %v663 = vpop.trf.xlu0
    %v664 = vpop.trf.xlu0
    %v666 = vsel %vm80, %v649, 0
    %v669 = vsel %vm80, %v650, 0
    %671 = vmatprep.subr.mxu0 0.0
    %672 = vmatpush1.msra.mxu0 %v154
    %673 = vmatprep.subr.mxu0 0.0
    %674 = vmatpush1.msra.mxu0 %v159
    %675 = vmatprep.subr.mxu0 0.0
    %676 = vmatpush1.msra.mxu0 0.0
    %677 = vmatprep.subr.mxu0 0.0
    %678 = vmatpush1.msra.mxu0 0.0
    %679 = vmatprep.subr.mxu0 0.0
    %680 = vmatpush1.msra.mxu0 0.0
    %681 = vmatprep.subr.mxu0 0.0
    %682 = vmatpush1.msra.mxu0 0.0
    %683 = vmatprep.subr.mxu0 0.0
    %684 = vmatpush1.msra.mxu0 0.0
    %685 = vmatprep.subr.mxu0 0.0
    %686 = vmatpush1.msra.mxu0 0.0
    %687 = vmatprep.subr.mxu0 0.0
    %688 = vmatpush1.msra.mxu0 0.0
    %689 = vmatprep.subr.mxu0 0.0
    %690 = vmatpush1.msra.mxu0 0.0
    %691 = vmatprep.subr.mxu0 0.0
    %692 = vmatpush1.msra.mxu0 0.0
    %693 = vmatprep.subr.mxu0 0.0
    %694 = vmatpush1.msra.mxu0 0.0
    %695 = vmatprep.subr.mxu0 0.0
    %696 = vmatpush1.msra.mxu0 0.0
    %697 = vmatprep.subr.mxu0 0.0
    %698 = vmatpush1.msra.mxu0 0.0
    %699 = vmatprep.subr.mxu0 0.0
    %700 = vmatpush1.msra.mxu0 0.0
    %701 = vmatprep.subr.mxu0 0.0
    %702 = vmatpush1.msra.mxu0 0.0
    %703 = vmatprep.subr.mxu0 0.0
    %704 = vmatpush1.msra.mxu0 0.0
    %705 = vmatprep.subr.mxu0 0.0
    %706 = vmatpush1.msra.mxu0 0.0
    %707 = vmatprep.subr.mxu0 0.0
    %708 = vmatpush1.msra.mxu0 0.0
    %709 = vmatprep.subr.mxu0 0.0
    %710 = vmatpush1.msra.mxu0 0.0
    %711 = vmatprep.subr.mxu0 0.0
    %712 = vmatpush1.msra.mxu0 0.0
    %713 = vmatprep.subr.mxu0 0.0
    %714 = vmatpush1.msra.mxu0 0.0
    %715 = vmatprep.subr.mxu0 0.0
    %716 = vmatpush1.msra.mxu0 0.0
    %717 = vmatprep.subr.mxu0 0.0
    %718 = vmatpush1.msra.mxu0 0.0
    %719 = vmatprep.subr.mxu0 0.0
    %720 = vmatpush1.msra.mxu0 0.0
    %721 = vmatprep.subr.mxu0 0.0
    %722 = vmatpush1.msra.mxu0 0.0
    %723 = vmatprep.subr.mxu0 0.0
    %724 = vmatpush1.msra.mxu0 0.0
    %725 = vmatprep.subr.mxu0 0.0
    %726 = vmatpush1.msra.mxu0 0.0
    %727 = vmatprep.subr.mxu0 0.0
    %728 = vmatpush1.msra.mxu0 0.0
    %729 = vmatprep.subr.mxu0 0.0
    %730 = vmatpush1.msra.mxu0 0.0
    %731 = vmatprep.subr.mxu0 0.0
    %732 = vmatpush1.msra.mxu0 0.0
    %733 = vmatprep.subr.mxu0 0.0
    %734 = vmatpush1.msra.mxu0 0.0
    %735 = vmatprep.mubr.f32.mxu0 0.0
    %736 = vmatmul.mubr.f32.gmra.mrb[0].mxu0 %v666
    %v737 = vpop.f32.mrb[0].mxu0
    %v738 = vadd.f32 0.0, %v737
    %v739 = vpop.f32.mrb[0].mxu0
    %740 = vmatprep.mubr.f32.mxu0 0.0
    %741 = vmatmul.mubr.f32.gmra.mrb[0].mxu0 %v669
    %v742 = vpop.f32.mrb[0].mxu0
    %v743 = vadd.f32 0.0, %v742
    %v744 = vpop.f32.mrb[0].mxu0
    %745 = vdwg.mxu0
    %746 = vrot.lane.b32.xlu0 %v154, 64
    %v747 = vpop.permute.xlu0 %746
    %748 = vrot.lane.b32.xlu0 %v159, 64
    %v749 = vpop.permute.xlu0 %748
    %v750 = vsel %vm168, %v747, 0
    %v752 = vsel %vm168, %v749, 0
    %754 = vmatprep.subr.mxu0 0.0
    %755 = vmatpush1.msra.mxu0 %v31
    %756 = vmatprep.subr.mxu0 0.0
    %757 = vmatpush1.msra.mxu0 %v32
    %758 = vmatprep.subr.mxu0 0.0
    %759 = vmatpush1.msra.mxu0 %v33
    %760 = vmatprep.subr.mxu0 0.0
    %761 = vmatpush1.msra.mxu0 %v34
    %762 = vmatprep.subr.mxu0 0.0
    %763 = vmatpush1.msra.mxu0 %v35
    %764 = vmatprep.subr.mxu0 0.0
    %765 = vmatpush1.msra.mxu0 %v36
    %766 = vmatprep.subr.mxu0 0.0
    %767 = vmatpush1.msra.mxu0 %v37
    %768 = vmatprep.subr.mxu0 0.0
    %769 = vmatpush1.msra.mxu0 %v38
    %770 = vmatprep.subr.mxu0 0.0
    %771 = vmatpush1.msra.mxu0 0.0
    %772 = vmatprep.subr.mxu0 0.0
    %773 = vmatpush1.msra.mxu0 0.0
    %774 = vmatprep.subr.mxu0 0.0
    %775 = vmatpush1.msra.mxu0 0.0
    %776 = vmatprep.subr.mxu0 0.0
    %777 = vmatpush1.msra.mxu0 0.0
    %778 = vmatprep.subr.mxu0 0.0
    %779 = vmatpush1.msra.mxu0 0.0
    %780 = vmatprep.subr.mxu0 0.0
    %781 = vmatpush1.msra.mxu0 0.0
    %782 = vmatprep.subr.mxu0 0.0
    %783 = vmatpush1.msra.mxu0 0.0
    %784 = vmatprep.subr.mxu0 0.0
    %785 = vmatpush1.msra.mxu0 0.0
    %786 = vmatprep.subr.mxu0 0.0
    %787 = vmatpush1.msra.mxu0 0.0
    %788 = vmatprep.subr.mxu0 0.0
    %789 = vmatpush1.msra.mxu0 0.0
    %790 = vmatprep.subr.mxu0 0.0
    %791 = vmatpush1.msra.mxu0 0.0
    %792 = vmatprep.subr.mxu0 0.0
    %793 = vmatpush1.msra.mxu0 0.0
    %794 = vmatprep.subr.mxu0 0.0
    %795 = vmatpush1.msra.mxu0 0.0
    %796 = vmatprep.subr.mxu0 0.0
    %797 = vmatpush1.msra.mxu0 0.0
    %798 = vmatprep.subr.mxu0 0.0
    %799 = vmatpush1.msra.mxu0 0.0
    %800 = vmatprep.subr.mxu0 0.0
    %801 = vmatpush1.msra.mxu0 0.0
    %802 = vmatprep.subr.mxu0 0.0
    %803 = vmatpush1.msra.mxu0 0.0
    %804 = vmatprep.subr.mxu0 0.0
    %805 = vmatpush1.msra.mxu0 0.0
    %806 = vmatprep.subr.mxu0 0.0
    %807 = vmatpush1.msra.mxu0 0.0
    %808 = vmatprep.subr.mxu0 0.0
    %809 = vmatpush1.msra.mxu0 0.0
    %810 = vmatprep.subr.mxu0 0.0
    %811 = vmatpush1.msra.mxu0 0.0
    %812 = vmatprep.subr.mxu0 0.0
    %813 = vmatpush1.msra.mxu0 0.0
    %814 = vmatprep.subr.mxu0 0.0
    %815 = vmatpush1.msra.mxu0 0.0
    %816 = vmatprep.subr.mxu0 0.0
    %817 = vmatpush1.msra.mxu0 0.0
    %818 = vmatprep.mubr.f32.mxu0 0.0
    %819 = vmatmul.mubr.f32.gmra.mrb[0].mxu0 %v750
    %v820 = vpop.f32.mrb[0].mxu0
    %v821 = vadd.f32 %v166, %v820
    %v822 = vpop.f32.mrb[0].mxu0
    %823 = vmatprep.mubr.f32.mxu0 0.0
    %824 = vmatmul.mubr.f32.gmra.mrb[0].mxu0 %v752
    %v825 = vpop.f32.mrb[0].mxu0
    %v826 = vadd.f32 %v166, %v825
    %v827 = vpop.f32.mrb[0].mxu0
    %828 = vdwg.mxu0
    %829 = vmax.xlane.f32.xlu0 %v821
    %v830 = vpop.xlane.xlu0 %829
    %831 = vmax.xlane.f32.xlu0 %v826
    %v832 = vpop.xlane.xlu0 %831
    %v833 = vsub.f32 %v821, %v830
    %v834 = vsub.f32 %v826, %v832
    %v835 = vmul.f32 %v833, 1.442695
    %v836 = vpow.pop %v835
    %v837 = vmul.f32 %v834, 1.442695
    %v838 = vpow.pop %v837
    %839 = vmatprep.subr.mxu0 0.0
    %840 = vmatpush1.msra.mxu0 %v40
    %841 = vmatprep.subr.mxu0 0.0
    %842 = vmatpush1.msra.mxu0 %v41
    %843 = vmatprep.subr.mxu0 0.0
    %844 = vmatpush1.msra.mxu0 %v42
    %845 = vmatprep.subr.mxu0 0.0
    %846 = vmatpush1.msra.mxu0 %v43
    %847 = vmatprep.subr.mxu0 0.0
    %848 = vmatpush1.msra.mxu0 %v44
    %849 = vmatprep.subr.mxu0 0.0
    %850 = vmatpush1.msra.mxu0 %v45
    %851 = vmatprep.subr.mxu0 0.0
    %852 = vmatpush1.msra.mxu0 %v46
    %853 = vmatprep.subr.mxu0 0.0
    %854 = vmatpush1.msra.mxu0 %v47
    %855 = vmatprep.subr.mxu0 0.0
    %856 = vmatpush1.msra.mxu0 %v48
    %857 = vmatprep.subr.mxu0 0.0
    %858 = vmatpush1.msra.mxu0 %v49
    %859 = vmatprep.subr.mxu0 0.0
    %860 = vmatpush1.msra.mxu0 %v50
    %861 = vmatprep.subr.mxu0 0.0
    %862 = vmatpush1.msra.mxu0 %v51
    %863 = vmatprep.subr.mxu0 0.0
    %864 = vmatpush1.msra.mxu0 %v52
    %865 = vmatprep.subr.mxu0 0.0
    %866 = vmatpush1.msra.mxu0 %v53
    %867 = vmatprep.subr.mxu0 0.0
    %868 = vmatpush1.msra.mxu0 %v54
    %869 = vmatprep.subr.mxu0 0.0
    %870 = vmatpush1.msra.mxu0 %v55
    %871 = vmatprep.subr.mxu0 0.0
    %872 = vmatpush1.msra.mxu0 0.0
    %873 = vmatprep.subr.mxu0 0.0
    %874 = vmatpush1.msra.mxu0 0.0
    %875 = vmatprep.subr.mxu0 0.0
    %876 = vmatpush1.msra.mxu0 0.0
    %877 = vmatprep.subr.mxu0 0.0
    %878 = vmatpush1.msra.mxu0 0.0
    %879 = vmatprep.subr.mxu0 0.0
    %880 = vmatpush1.msra.mxu0 0.0
    %881 = vmatprep.subr.mxu0 0.0
    %882 = vmatpush1.msra.mxu0 0.0
    %883 = vmatprep.subr.mxu0 0.0
    %884 = vmatpush1.msra.mxu0 0.0
    %885 = vmatprep.subr.mxu0 0.0
    %886 = vmatpush1.msra.mxu0 0.0
    %887 = vmatprep.subr.mxu0 0.0
    %888 = vmatpush1.msra.mxu0 0.0
    %889 = vmatprep.subr.mxu0 0.0
    %890 = vmatpush1.msra.mxu0 0.0
    %891 = vmatprep.subr.mxu0 0.0
    %892 = vmatpush1.msra.mxu0 0.0
    %893 = vmatprep.subr.mxu0 0.0
    %894 = vmatpush1.msra.mxu0 0.0
    %895 = vmatprep.subr.mxu0 0.0
    %896 = vmatpush1.msra.mxu0 0.0
    %897 = vmatprep.subr.mxu0 0.0
    %898 = vmatpush1.msra.mxu0 0.0
    %899 = vmatprep.subr.mxu0 0.0
    %900 = vmatpush1.msra.mxu0 0.0
    %901 = vmatprep.subr.mxu0 0.0
    %902 = vmatpush1.msra.mxu0 0.0
    %903 = vmatprep.mubr.f32.mxu0 0.0
    %904 = vmatmul.mubr.f32.gmra.mrb[0].mxu0 %v836
    %v905 = vpop.f32.mrb[0].mxu0
    %v906 = vadd.f32 0.0, %v905
    %v907 = vpop.f32.mrb[0].mxu0
    %908 = vmatprep.mubr.f32.mxu0 0.0
    %909 = vmatmul.mubr.f32.gmra.mrb[0].mxu0 %v838
    %v910 = vpop.f32.mrb[0].mxu0
    %v911 = vadd.f32 0.0, %v910
    %v912 = vpop.f32.mrb[0].mxu0
    %913 = vdwg.mxu0
    %v914 = vrcp.pop %v906
    %v915 = vrcp.pop %v911
    %v916 = vmul.f32 %v836, %v914
    %v917 = vmul.f32 %v838, %v915
    %918 = vmatprep.subr.mxu0 0.0
    %919 = vmatpush1.msra.mxu0 %v56
    %920 = vmatprep.subr.mxu0 0.0
    %921 = vmatpush1.msra.mxu0 %v57
    %922 = vmatprep.subr.mxu0 0.0
    %923 = vmatpush1.msra.mxu0 %v58
    %924 = vmatprep.subr.mxu0 0.0
    %925 = vmatpush1.msra.mxu0 %v59
    %926 = vmatprep.subr.mxu0 0.0
    %927 = vmatpush1.msra.mxu0 %v60
    %928 = vmatprep.subr.mxu0 0.0
    %929 = vmatpush1.msra.mxu0 %v61
    %930 = vmatprep.subr.mxu0 0.0
    %931 = vmatpush1.msra.mxu0 %v62
    %932 = vmatprep.subr.mxu0 0.0
    %933 = vmatpush1.msra.mxu0 %v63
    %934 = vmatprep.subr.mxu0 0.0
    %935 = vmatpush1.msra.mxu0 %v64
    %936 = vmatprep.subr.mxu0 0.0
    %937 = vmatpush1.msra.mxu0 %v65
    %938 = vmatprep.subr.mxu0 0.0
    %939 = vmatpush1.msra.mxu0 %v66
    %940 = vmatprep.subr.mxu0 0.0
    %941 = vmatpush1.msra.mxu0 %v67
    %942 = vmatprep.subr.mxu0 0.0
    %943 = vmatpush1.msra.mxu0 %v68
    %944 = vmatprep.subr.mxu0 0.0
    %945 = vmatpush1.msra.mxu0 %v69
    %946 = vmatprep.subr.mxu0 0.0
    %947 = vmatpush1.msra.mxu0 %v70
    %948 = vmatprep.subr.mxu0 0.0
    %949 = vmatpush1.msra.mxu0 %v71
    %950 = vmatprep.subr.mxu0 0.0
    %951 = vmatpush1.msra.mxu0 0.0
    %952 = vmatprep.subr.mxu0 0.0
    %953 = vmatpush1.msra.mxu0 0.0
    %954 = vmatprep.subr.mxu0 0.0
    %955 = vmatpush1.msra.mxu0 0.0
    %956 = vmatprep.subr.mxu0 0.0
    %957 = vmatpush1.msra.mxu0 0.0
    %958 = vmatprep.subr.mxu0 0.0
    %959 = vmatpush1.msra.mxu0 0.0
    %960 = vmatprep.subr.mxu0 0.0
    %961 = vmatpush1.msra.mxu0 0.0
    %962 = vmatprep.subr.mxu0 0.0
    %963 = vmatpush1.msra.mxu0 0.0
    %964 = vmatprep.subr.mxu0 0.0
    %965 = vmatpush1.msra.mxu0 0.0
    %966 = vmatprep.subr.mxu0 0.0
    %967 = vmatpush1.msra.mxu0 0.0
    %968 = vmatprep.subr.mxu0 0.0
    %969 = vmatpush1.msra.mxu0 0.0
    %970 = vmatprep.subr.mxu0 0.0
    %971 = vmatpush1.msra.mxu0 0.0
    %972 = vmatprep.subr.mxu0 0.0
    %973 = vmatpush1.msra.mxu0 0.0
    %974 = vmatprep.subr.mxu0 0.0
    %975 = vmatpush1.msra.mxu0 0.0
    %976 = vmatprep.subr.mxu0 0.0
    %977 = vmatpush1.msra.mxu0 0.0
    %978 = vmatprep.subr.mxu0 0.0
    %979 = vmatpush1.msra.mxu0 0.0
    %980 = vmatprep.subr.mxu0 0.0
    %981 = vmatpush1.msra.mxu0 0.0
    %982 = vmatprep.mubr.f32.mxu0 0.0
    %983 = vmatmul.mubr.f32.gmra.mrb[0].mxu0 %v916
    %v984 = vpop.f32.mrb[0].mxu0
    %v985 = vadd.f32 0.0, %v984
    %v986 = vpop.f32.mrb[0].mxu0
    %987 = vmatprep.mubr.f32.mxu0 0.0
    %988 = vmatmul.mubr.f32.gmra.mrb[0].mxu0 %v917
    %v989 = vpop.f32.mrb[0].mxu0
    %v990 = vadd.f32 0.0, %v989
    %v991 = vpop.f32.mrb[0].mxu0
    %992 = vdwg.mxu0
    %995 = vrot.lane.b32.xlu0 %v985, 16
    %v996 = vpop.permute.xlu0 %995
    %997 = vrot.lane.b32.xlu0 %v990, 16
    %v998 = vpop.permute.xlu0 %997
    %1001 = vrot.lane.b32.xlu0 %v985, 32
    %v1002 = vpop.permute.xlu0 %1001
    %1003 = vrot.lane.b32.xlu0 %v990, 32
    %v1004 = vpop.permute.xlu0 %1003
    %1007 = vrot.lane.b32.xlu0 %v985, 48
    %v1008 = vpop.permute.xlu0 %1007
    %1009 = vrot.lane.b32.xlu0 %v990, 48
    %v1010 = vpop.permute.xlu0 %1009
    %v1013 = vsel %vm80, %v985, %v996
    %v1014 = vsel %vm80, %v990, %v998
    %v1015 = vsel %vm436, %v1013, %v1002
    %v1016 = vsel %vm436, %v1014, %v1004
    %v1017 = vsel %vm439, %v1015, %v1008
    %v1018 = vsel %vm439, %v1016, %v1010
    %1021 = vrot.lane.b32.xlu0 %v1017, 64
    %v1022 = vpop.permute.xlu0 %1021
    %1023 = vrot.lane.b32.xlu0 %v1018, 64
    %v1024 = vpop.permute.xlu0 %1023
    %v1027 = vmul.f32 %v154, %v1022
    %v1028 = vmul.f32 %v159, %v1024
    %1031 = vrot.lane.b32.xlu0 %v1027, 64
    %v1032 = vpop.permute.xlu0 %1031
    %1033 = vrot.lane.b32.xlu0 %v1028, 64
    %v1034 = vpop.permute.xlu0 %1033
    %v1035 = vsel %vm168, %v1032, 0
    %v1037 = vsel %vm168, %v1034, 0
    %1039 = vmatprep.subr.mxu0 0.0
    %1040 = vmatpush1.msra.mxu0 %v72
    %1041 = vmatprep.subr.mxu0 0.0
    %1042 = vmatpush1.msra.mxu0 %v73
    %1043 = vmatprep.subr.mxu0 0.0
    %1044 = vmatpush1.msra.mxu0 %v74
    %1045 = vmatprep.subr.mxu0 0.0
    %1046 = vmatpush1.msra.mxu0 %v75
    %1047 = vmatprep.subr.mxu0 0.0
    %1048 = vmatpush1.msra.mxu0 %v76
    %1049 = vmatprep.subr.mxu0 0.0
    %1050 = vmatpush1.msra.mxu0 %v77
    %1051 = vmatprep.subr.mxu0 0.0
    %1052 = vmatpush1.msra.mxu0 %v78
    %1053 = vmatprep.subr.mxu0 0.0
    %1054 = vmatpush1.msra.mxu0 %v79
    %1055 = vmatprep.subr.mxu0 0.0
    %1056 = vmatpush1.msra.mxu0 0.0
    %1057 = vmatprep.subr.mxu0 0.0
    %1058 = vmatpush1.msra.mxu0 0.0
    %1059 = vmatprep.subr.mxu0 0.0
    %1060 = vmatpush1.msra.mxu0 0.0
    %1061 = vmatprep.subr.mxu0 0.0
    %1062 = vmatpush1.msra.mxu0 0.0
    %1063 = vmatprep.subr.mxu0 0.0
    %1064 = vmatpush1.msra.mxu0 0.0
    %1065 = vmatprep.subr.mxu0 0.0
    %1066 = vmatpush1.msra.mxu0 0.0
    %1067 = vmatprep.subr.mxu0 0.0
    %1068 = vmatpush1.msra.mxu0 0.0
    %1069 = vmatprep.subr.mxu0 0.0
    %1070 = vmatpush1.msra.mxu0 0.0
    %1071 = vmatprep.subr.mxu0 0.0
    %1072 = vmatpush1.msra.mxu0 0.0
    %1073 = vmatprep.subr.mxu0 0.0
    %1074 = vmatpush1.msra.mxu0 0.0
    %1075 = vmatprep.subr.mxu0 0.0
    %1076 = vmatpush1.msra.mxu0 0.0
    %1077 = vmatprep.subr.mxu0 0.0
    %1078 = vmatpush1.msra.mxu0 0.0
    %1079 = vmatprep.subr.mxu0 0.0
    %1080 = vmatpush1.msra.mxu0 0.0
    %1081 = vmatprep.subr.mxu0 0.0
    %1082 = vmatpush1.msra.mxu0 0.0
    %1083 = vmatprep.subr.mxu0 0.0
    %1084 = vmatpush1.msra.mxu0 0.0
    %1085 = vmatprep.subr.mxu0 0.0
    %1086 = vmatpush1.msra.mxu0 0.0
    %1087 = vmatprep.subr.mxu0 0.0
    %1088 = vmatpush1.msra.mxu0 0.0
    %1089 = vmatprep.subr.mxu0 0.0
    %1090 = vmatpush1.msra.mxu0 0.0
    %1091 = vmatprep.subr.mxu0 0.0
    %1092 = vmatpush1.msra.mxu0 0.0
    %1093 = vmatprep.subr.mxu0 0.0
    %1094 = vmatpush1.msra.mxu0 0.0
    %1095 = vmatprep.subr.mxu0 0.0
    %1096 = vmatpush1.msra.mxu0 0.0
    %1097 = vmatprep.subr.mxu0 0.0
    %1098 = vmatpush1.msra.mxu0 0.0
    %1099 = vmatprep.subr.mxu0 0.0
    %1100 = vmatpush1.msra.mxu0 0.0
    %1101 = vmatprep.subr.mxu0 0.0
    %1102 = vmatpush1.msra.mxu0 0.0
    %1103 = vmatprep.mubr.f32.mxu0 0.0
    %1104 = vmatmul.mubr.f32.gmra.mrb[0].mxu0 %v1035
    %v1105 = vpop.f32.mrb[0].mxu0
    %v1106 = vadd.f32 0.0, %v1105
    %v1107 = vpop.f32.mrb[0].mxu0
    %1108 = vmatprep.mubr.f32.mxu0 0.0
    %1109 = vmatmul.mubr.f32.gmra.mrb[0].mxu0 %v1037
    %v1110 = vpop.f32.mrb[0].mxu0
    %v1111 = vadd.f32 0.0, %v1110
    %v1112 = vpop.f32.mrb[0].mxu0
    %1113 = vdwg.mxu0
    %v1115 = vsel %vm525, %v1106, 0
    %v1118 = vsel %vm525, %v1111, 0
    %1120 = vmatprep.subr.mxu0 0.0
    %1121 = vmatpush1.xpose.msra.mxu0 %v1115
    %1122 = vmatprep.subr.mxu0 0.0
    %1123 = vmatpush1.xpose.msra.mxu0 %v1118
    %1124 = vmatprep.subr.mxu0 0.0
    %1125 = vmatpush1.xpose.msra.mxu0 0.0
    %1126 = vmatprep.subr.mxu0 0.0
    %1127 = vmatpush1.xpose.msra.mxu0 0.0
    %1128 = vmatprep.subr.mxu0 0.0
    %1129 = vmatpush1.xpose.msra.mxu0 0.0
    %1130 = vmatprep.subr.mxu0 0.0
    %1131 = vmatpush1.xpose.msra.mxu0 0.0
    %1132 = vmatprep.subr.mxu0 0.0
    %1133 = vmatpush1.xpose.msra.mxu0 0.0
    %1134 = vmatprep.subr.mxu0 0.0
    %1135 = vmatpush1.xpose.msra.mxu0 0.0
    %1136 = vmatprep.subr.mxu0 0.0
    %1137 = vmatpush1.xpose.msra.mxu0 0.0
    %1138 = vmatprep.subr.mxu0 0.0
    %1139 = vmatpush1.xpose.msra.mxu0 0.0
    %1140 = vmatprep.subr.mxu0 0.0
    %1141 = vmatpush1.xpose.msra.mxu0 0.0
    %1142 = vmatprep.subr.mxu0 0.0
    %1143 = vmatpush1.xpose.msra.mxu0 0.0
    %1144 = vmatprep.subr.mxu0 0.0
    %1145 = vmatpush1.xpose.msra.mxu0 0.0
    %1146 = vmatprep.subr.mxu0 0.0
    %1147 = vmatpush1.xpose.msra.mxu0 0.0
    %1148 = vmatprep.subr.mxu0 0.0
    %1149 = vmatpush1.xpose.msra.mxu0 0.0
    %1150 = vmatprep.subr.mxu0 0.0
    %1151 = vmatpush1.xpose.msra.mxu0 0.0
    %1152 = vmatprep.subr.mxu0 0.0
    %1153 = vmatpush1.xpose.msra.mxu0 0.0
    %1154 = vmatprep.subr.mxu0 0.0
    %1155 = vmatpush1.xpose.msra.mxu0 0.0
    %1156 = vmatprep.subr.mxu0 0.0
    %1157 = vmatpush1.xpose.msra.mxu0 0.0
    %1158 = vmatprep.subr.mxu0 0.0
    %1159 = vmatpush1.xpose.msra.mxu0 0.0
    %1160 = vmatprep.subr.mxu0 0.0
    %1161 = vmatpush1.xpose.msra.mxu0 0.0
    %1162 = vmatprep.subr.mxu0 0.0
    %1163 = vmatpush1.xpose.msra.mxu0 0.0
    %1164 = vmatprep.subr.mxu0 0.0
    %1165 = vmatpush1.xpose.msra.mxu0 0.0
    %1166 = vmatprep.subr.mxu0 0.0
    %1167 = vmatpush1.xpose.msra.mxu0 0.0
    %1168 = vmatprep.subr.mxu0 0.0
    %1169 = vmatpush1.xpose.msra.mxu0 0.0
    %1170 = vmatprep.subr.mxu0 0.0
    %1171 = vmatpush1.xpose.msra.mxu0 0.0
    %1172 = vmatprep.subr.mxu0 0.0
    %1173 = vmatpush1.xpose.msra.mxu0 0.0
    %1174 = vmatprep.subr.mxu0 0.0
    %1175 = vmatpush1.xpose.msra.mxu0 0.0
    %1176 = vmatprep.subr.mxu0 0.0
    %1177 = vmatpush1.xpose.msra.mxu0 0.0
    %1178 = vmatprep.subr.mxu0 0.0
    %1179 = vmatpush1.xpose.msra.mxu0 0.0
    %1180 = vmatprep.subr.mxu0 0.0
    %1181 = vmatpush1.xpose.msra.mxu0 0.0
    %1182 = vmatprep.subr.mxu0 0.0
    %1183 = vmatpush1.xpose.msra.mxu0 0.0
    %1184 = vmatprep.mubr.f32.mxu0 0.0
    %1185 = vmatmul.mubr.f32.gmra.mrb[0].mxu0 %v1115
    %v1186 = vpop.f32.mrb[0].mxu0
    %v1187 = vadd.f32 0.0, %v1186
    %v1188 = vpop.f32.mrb[0].mxu0
    %1189 = vmatprep.mubr.f32.mxu0 0.0
    %1190 = vmatmul.mubr.f32.gmra.mrb[0].mxu0 %v1118
    %v1191 = vpop.f32.mrb[0].mxu0
    %v1192 = vadd.f32 0.0, %v1191
    %v1193 = vpop.f32.mrb[0].mxu0
    %1194 = vdwg.mxu0
    %v1195 = vmul.f32 %v1187, 0.5
    %v1196 = vmul.f32 %v1192, 0.5
    %v1197 = vmax.f32 %v1195, 0.0
    %v1198 = vmax.f32 %v1196, 0.0
    %v1199 = vsel %vm80, %v1197, -inf
    %1200 = vmax.xlane.f32.xlu0 %v1199
    %v1201 = vpop.xlane.xlu0 %1200
    %v1202 = vsel %vm80, %v1198, -inf
    %1203 = vmax.xlane.f32.xlu0 %v1202
    %v1204 = vpop.xlane.xlu0 %1203
    %v1205 = vsub.f32 %v1197, %v1201
    %v1206 = vsub.f32 %v1198, %v1204
    %v1207 = vmul.f32 %v1205, 1.442695
    %v1208 = vpow.pop %v1207
    %v1209 = vmul.f32 %v1206, 1.442695
    %v1210 = vpow.pop %v1209
    %v1211 = vsel %vm80, %v1208, 0.0
    %1212 = vadd.xlane.f32.xlu0 %v1211
    %v1213 = vpop.xlane.xlu0 %1212
    %v1214 = vsel %vm80, %v1210, 0.0
    %1215 = vadd.xlane.f32.xlu0 %v1214
    %v1216 = vpop.xlane.xlu0 %1215
    %v1217 = vrcp.pop %v1213
    %v1218 = vrcp.pop %v1216
    %v1219 = vmul.f32 %v1208, %v1217
    %v1220 = vmul.f32 %v1210, %v1218
    %1221 = vxpose.xlu0.b32.start [1/16] %v1219, 128
    %1222 = vxpose.xlu0.b32.cont [2/16] %v1220, 128
    %1223 = vxpose.xlu0.b32.cont [3/16] 0.0, 128
    %1224 = vxpose.xlu0.b32.cont [4/16] 0.0, 128
    %1225 = vxpose.xlu0.b32.cont [5/16] 0.0, 128
    %1226 = vxpose.xlu0.b32.cont [6/16] 0.0, 128
    %1227 = vxpose.xlu0.b32.cont [7/16] 0.0, 128
    %1228 = vxpose.xlu0.b32.cont [8/16] 0.0, 128
    %1229 = vxpose.xlu0.b32.cont [9/16] 0.0, 128
    %1230 = vxpose.xlu0.b32.cont [10/16] 0.0, 128
    %1231 = vxpose.xlu0.b32.cont [11/16] 0.0, 128
    %1232 = vxpose.xlu0.b32.cont [12/16] 0.0, 128
    %1233 = vxpose.xlu0.b32.cont [13/16] 0.0, 128
    %1234 = vxpose.xlu0.b32.cont [14/16] 0.0, 128
    %1235 = vxpose.xlu0.b32.cont [15/16] 0.0, 128
    %1236 = vxpose.xlu0.b32.end [16/16] 0.0, 128
    %v1237 = vpop.trf.xlu0
    %v1238 = vpop.trf.xlu0
    %v1239 = vpop.trf.xlu0
    %v1240 = vpop.trf.xlu0
    %v1241 = vpop.trf.xlu0
    %v1242 = vpop.trf.xlu0
    %v1243 = vpop.trf.xlu0
    %v1244 = vpop.trf.xlu0
    %v1245 = vpop.trf.xlu0
    %v1246 = vpop.trf.xlu0
    %v1247 = vpop.trf.xlu0
    %v1248 = vpop.trf.xlu0
    %v1249 = vpop.trf.xlu0
    %v1250 = vpop.trf.xlu0
    %v1251 = vpop.trf.xlu0
    %v1252 = vpop.trf.xlu0
    %v1256 = vsel %vm80, %v1237, 0
    %v1259 = vsel %vm80, %v1238, 0
    %1261 = vmatprep.subr.mxu0 0.0
    %1262 = vmatpush1.msra.mxu0 %v747
    %1263 = vmatprep.subr.mxu0 0.0
    %1264 = vmatpush1.msra.mxu0 %v749
    %1265 = vmatprep.subr.mxu0 0.0
    %1266 = vmatpush1.msra.mxu0 0.0
    %1267 = vmatprep.subr.mxu0 0.0
    %1268 = vmatpush1.msra.mxu0 0.0
    %1269 = vmatprep.subr.mxu0 0.0
    %1270 = vmatpush1.msra.mxu0 0.0
    %1271 = vmatprep.subr.mxu0 0.0
    %1272 = vmatpush1.msra.mxu0 0.0
    %1273 = vmatprep.subr.mxu0 0.0
    %1274 = vmatpush1.msra.mxu0 0.0
    %1275 = vmatprep.subr.mxu0 0.0
    %1276 = vmatpush1.msra.mxu0 0.0
    %1277 = vmatprep.subr.mxu0 0.0
    %1278 = vmatpush1.msra.mxu0 0.0
    %1279 = vmatprep.subr.mxu0 0.0
    %1280 = vmatpush1.msra.mxu0 0.0
    %1281 = vmatprep.subr.mxu0 0.0
    %1282 = vmatpush1.msra.mxu0 0.0
    %1283 = vmatprep.subr.mxu0 0.0
    %1284 = vmatpush1.msra.mxu0 0.0
    %1285 = vmatprep.subr.mxu0 0.0
    %1286 = vmatpush1.msra.mxu0 0.0
    %1287 = vmatprep.subr.mxu0 0.0
    %1288 = vmatpush1.msra.mxu0 0.0
    %1289 = vmatprep.subr.mxu0 0.0
    %1290 = vmatpush1.msra.mxu0 0.0
    %1291 = vmatprep.subr.mxu0 0.0
    %1292 = vmatpush1.msra.mxu0 0.0
    %1293 = vmatprep.subr.mxu0 0.0
    %1294 = vmatpush1.msra.mxu0 0.0
    %1295 = vmatprep.subr.mxu0 0.0
    %1296 = vmatpush1.msra.mxu0 0.0
    %1297 = vmatprep.subr.mxu0 0.0
    %1298 = vmatpush1.msra.mxu0 0.0
    %1299 = vmatprep.subr.mxu0 0.0
    %1300 = vmatpush1.msra.mxu0 0.0
    %1301 = vmatprep.subr.mxu0 0.0
    %1302 = vmatpush1.msra.mxu0 0.0
    %1303 = vmatprep.subr.mxu0 0.0
    %1304 = vmatpush1.msra.mxu0 0.0
    %1305 = vmatprep.subr.mxu0 0.0
    %1306 = vmatpush1.msra.mxu0 0.0
    %1307 = vmatprep.subr.mxu0 0.0
    %1308 = vmatpush1.msra.mxu0 0.0
    %1309 = vmatprep.subr.mxu0 0.0
    %1310 = vmatpush1.msra.mxu0 0.0
    %1311 = vmatprep.subr.mxu0 0.0
    %1312 = vmatpush1.msra.mxu0 0.0
    %1313 = vmatprep.subr.mxu0 0.0
    %1314 = vmatpush1.msra.mxu0 0.0
    %1315 = vmatprep.subr.mxu0 0.0
    %1316 = vmatpush1.msra.mxu0 0.0
    %1317 = vmatprep.subr.mxu0 0.0
    %1318 = vmatpush1.msra.mxu0 0.0
    %1319 = vmatprep.subr.mxu0 0.0
    %1320 = vmatpush1.msra.mxu0 0.0
    %1321 = vmatprep.subr.mxu0 0.0
    %1322 = vmatpush1.msra.mxu0 0.0
    %1323 = vmatprep.subr.mxu0 0.0
    %1324 = vmatpush1.msra.mxu0 0.0
    %1325 = vmatprep.mubr.f32.mxu0 0.0
    %1326 = vmatmul.mubr.f32.gmra.mrb[0].mxu0 %v1256
    %v1327 = vpop.f32.mrb[0].mxu0
    %v1328 = vadd.f32 0.0, %v1327
    %v1329 = vpop.f32.mrb[0].mxu0
    %1330 = vmatprep.mubr.f32.mxu0 0.0
    %1331 = vmatmul.mubr.f32.gmra.mrb[0].mxu0 %v1259
    %v1332 = vpop.f32.mrb[0].mxu0
    %v1333 = vadd.f32 0.0, %v1332
    %v1334 = vpop.f32.mrb[0].mxu0
    %1335 = vdwg.mxu0
    %1338 = vrot.lane.b32.xlu0 %v1328, 64
    %v1339 = vpop.permute.xlu0 %1338
    %1340 = vrot.lane.b32.xlu0 %v1333, 64
    %v1341 = vpop.permute.xlu0 %1340
    %v1344 = vsel %vm168, %v738, %v1339
    %v1345 = vsel %vm168, %v743, %v1341
    %1346 = vst [vmem:[#allocation2] sm:$0xff] %v1344
    %1347 = vst [vmem:[#allocation2 + $0x8] sm:$0xff] %v1345
    // Predicated region
    $region30: #{tpu_custom_call.1} parent=1 // pred_check
      _
    $region31: #{tpu_custom_call.1} parent=1 // pred_check_branch
      %1349 = sbr.rel (0) target = $region33
    $region32: #{tpu_custom_call.1} parent=1 // pred_region
      %s1351 = ssub.s32 256, 256
      %1352 = vsyncadd [#allocation3], %s1351
      %s1353 = sshll.u32 [#allocation2], 4
      %s1354 = int_to_ptr.vmem [resolvable:$true] %s1353
      %1359 = dma.vmem_to_hbm [thread:$0]  %s1354, 256, %s7, [#allocation3], 128, 128, 8
    $region33: #{tpu_custom_call.1} parent=1 // pred_fallthru
      _
    // Predicated region
    $region34: #{tpu_custom_call.1} parent=1 // pred_check
      _
    $region35: #{tpu_custom_call.1} parent=1 // pred_check_branch
      %1361 = sbr.rel (0) target = $region37
    $region36: #{tpu_custom_call.1} parent=1 // pred_region
      %1362 = dma.done [#allocation3], 256
    $region37: #{tpu_custom_call.1} parent=1 // pred_fallthru
      _
    %1363 = vsyncpa [#allocation3], 1

</llo_original>
